<compile_context>
chip_gen: v5e
topology: v5e:2x2
jax: 0.10.0
libtpu: 0.0.40
codegen_flags: <defaults>
</compile_context>

<pallas_src>
from functools import partial

import jax
import jax.numpy as jnp
from jax import lax
from jax.experimental import pallas as pl
from jax.experimental.pallas import tpu as pltpu

LANE = 128                     # TPU lane width: pad GEMM output columns to this
TM_MAX = 256                   # max rows per block (splits M=512 over 2 TCs on v7x)
VMEM_LIMIT = 32 * 1024 * 1024  # safe on v5e/v6e (128 MiB) and v7x (64 MiB)

# Static architecture description (Python ints only -> stays static under jit).
ARCH = dict(
    c_in=4, c_in_pad=8, z_dim=32,
    enc1=dict(cout=8, k=3, stride=2, padding=1),
    enc2=dict(cout=16, k=3, stride=2, padding=1),
    feat=(4, 4, 16),  # encoder bottleneck / decoder seed feature map (H, W, C) NHWC
    dec1=dict(cout=8, k=3, stride=2, padding=1, output_padding=1),
    dec2=dict(cout=4, k=3, stride=2, padding=1, output_padding=1),
)


def _round_up(x, m):
    return ((x + m - 1) // m) * m


# ----------------------------------------------------------------------------
# Pallas kernels
# ----------------------------------------------------------------------------
def _matmul_bias_act_kernel(x_ref, w_ref, b_ref, o_ref, *, act):
    """Fused (tm,K)@(K,N) + bias + activation. bf16 operands, f32 accumulation,
    f32 epilogue math, cast only on the final store (v5e-friendly)."""
    y = jnp.dot(x_ref[...], w_ref[...], preferred_element_type=jnp.float32)
    y = y + b_ref[...]                       # b is (1, N) f32, broadcasts over rows
    if act == "relu":
        y = jnp.maximum(y, 0.0)
    elif act == "sigmoid":
        y = jax.nn.sigmoid(y)                # EUP transcendental path, not a VALU divide chain
    o_ref[...] = y.astype(o_ref.dtype)


def _enc_head_kernel(h_ref, w_ref, b_ref, eps_ref, mu_ref, lv_ref, z_ref, *, z_dim):
    """Fused encoder head: one (M,256)x(256,2Z) matmul produces [mu | log_var],
    and the reparameterization z = mu + eps * exp(log_var / 2) is done in the
    same epilogue (no HBM round-trip of mu / log_var)."""
    y = jnp.dot(h_ref[...], w_ref[...], preferred_element_type=jnp.float32)
    y = y + b_ref[...]
    mu = y[:, :z_dim]
    lv = y[:, z_dim:]
    mu_ref[...] = mu
    lv_ref[...] = lv
    z_ref[...] = mu + eps_ref[...] * jnp.exp(lv * 0.5)


# ----------------------------------------------------------------------------
# Pallas wrappers
# ----------------------------------------------------------------------------
def pallas_linear(x, w, b_row, act="none", out_dtype=jnp.float32):
    """x:(M,K) bf16, w:(K,N) bf16 (pre-transposed / pre-padded at init),
    b_row:(1,N) f32 -> (M,N) out_dtype. Grid over M rows (parallel across TCs)."""
    M, K = x.shape
    Kw, N = w.shape
    assert K == Kw, (K, Kw)
    tm = TM_MAX if (M > TM_MAX and M % TM_MAX == 0) else M
    grid = (M // tm,)
    return pl.pallas_call(
        partial(_matmul_bias_act_kernel, act=act),
        grid=grid,
        in_specs=[
            pl.BlockSpec((tm, K), lambda i: (i, 0)),
            pl.BlockSpec((K, N), lambda i: (0, 0)),
            pl.BlockSpec((1, N), lambda i: (0, 0)),
        ],
        out_specs=pl.BlockSpec((tm, N), lambda i: (i, 0)),
        out_shape=jax.ShapeDtypeStruct((M, N), out_dtype),
        compiler_params=pltpu.CompilerParams(
            dimension_semantics=("parallel",),
            vmem_limit_bytes=VMEM_LIMIT,
        ),
    )(x, w, b_row)


def pallas_enc_head(h_flat, w_head, b_head, eps, z_dim):
    """h_flat:(M,256) bf16, w_head:(256,2Z) bf16, b_head:(1,2Z) f32, eps:(M,Z) f32
    -> (mu, log_var, z), each (M,Z) f32."""
    M, K = h_flat.shape
    _, N2 = w_head.shape
    out_shape = tuple(jax.ShapeDtypeStruct((M, z_dim), jnp.float32) for _ in range(3))
    return pl.pallas_call(
        partial(_enc_head_kernel, z_dim=z_dim),
        grid=(1,),
        in_specs=[
            pl.BlockSpec((M, K), lambda i: (0, 0)),
            pl.BlockSpec((K, N2), lambda i: (0, 0)),
            pl.BlockSpec((1, N2), lambda i: (0, 0)),
            pl.BlockSpec((M, z_dim), lambda i: (0, 0)),
        ],
        out_specs=tuple(pl.BlockSpec((M, z_dim), lambda i: (0, 0)) for _ in range(3)),
        out_shape=out_shape,
        compiler_params=pltpu.CompilerParams(
            dimension_semantics=("arbitrary",),
            vmem_limit_bytes=VMEM_LIMIT,
        ),
    )(h_flat, w_head, b_head, eps)


# ----------------------------------------------------------------------------
# Conv / ConvTranspose as GEMMs (im2col glue stays in XLA; weights pre-packed)
# ----------------------------------------------------------------------------
def _im2col(x, kh, kw, stride, padding):
    N, H, W, C = x.shape
    if padding:
        x = jnp.pad(x, ((0, 0), (padding, padding), (padding, padding), (0, 0)))
    Ho = (H + 2 * padding - kh) // stride + 1
    Wo = (W + 2 * padding - kw) // stride + 1
    patches = [x[:, i:i + stride * Ho:stride, j:j + stride * Wo:stride, :]
               for i in range(kh) for j in range(kw)]
    cols = jnp.stack(patches, axis=-2).reshape(N * Ho * Wo, kh * kw * C)
    return cols, Ho, Wo


def conv2d_gemm(x_nhwc, w_mat, b_row, cfg, act, out_dtype):
    """Conv as GEMM; kernel writes a lane-dense (M,128) slab, sliced back to Cout."""
    N = x_nhwc.shape[0]
    cols, Ho, Wo = _im2col(x_nhwc, cfg["k"], cfg["k"], cfg["stride"], cfg["padding"])
    y = pallas_linear(cols, w_mat, b_row, act=act, out_dtype=out_dtype)
    return y[:, :cfg["cout"]].reshape(N, Ho, Wo, cfg["cout"])


def conv_transpose2d_gemm(x_nhwc, w_mat, b_row, cfg, act, out_dtype):
    """ConvT == stride-1 conv over the interior-dilated, edge-padded input with the
    pre-computed (swapped + spatially flipped) weight. Dilation + padding is a
    single lax.pad (interior padding), not a scatter."""
    k, s, p, op = cfg["k"], cfg["stride"], cfg["padding"], cfg["output_padding"]
    lead, trail = k - 1 - p, k - 1 - p + op
    zero = jnp.zeros((), x_nhwc.dtype)
    xd = lax.pad(x_nhwc, zero,
                 [(0, 0, 0), (lead, trail, s - 1), (lead, trail, s - 1), (0, 0, 0)])
    eq_cfg = dict(k=k, stride=1, padding=0, cout=cfg["cout"])
    return conv2d_gemm(xd, w_mat, b_row, eq_cfg, act, out_dtype)


# ----------------------------------------------------------------------------
# Parameters: raw PyTorch-layout init + one-time packing into kernel layouts
# ----------------------------------------------------------------------------
def init_raw_params(key):
    """Representative random params in PyTorch layouts (Conv: OIHW, ConvT: IOHW,
    Linear: (out, in))."""
    A = ARCH
    ks = jax.random.split(key, 8)

    def w(k, shape, fan_in):
        return jax.random.normal(k, shape, jnp.float32) / jnp.sqrt(float(fan_in))

    z = A["z_dim"]
    feat = A["feat"][0] * A["feat"][1] * A["feat"][2]
    p = {}
    p["enc_w1"] = w(ks[0], (A["enc1"]["cout"], A["c_in"], 3, 3), A["c_in"] * 9)
    p["enc_b1"] = jnp.zeros((A["enc1"]["cout"],), jnp.float32)
    p["enc_w2"] = w(ks[1], (A["enc2"]["cout"], A["enc1"]["cout"], 3, 3), A["enc1"]["cout"] * 9)
    p["enc_b2"] = jnp.zeros((A["enc2"]["cout"],), jnp.float32)
    p["fc_mu_w"] = w(ks[2], (z, feat), feat)
    p["fc_mu_b"] = jnp.zeros((z,), jnp.float32)
    p["fc_lv_w"] = w(ks[3], (z, feat), feat)
    p["fc_lv_b"] = jnp.zeros((z,), jnp.float32)
    p["dec_fc_w"] = w(ks[4], (feat, z), z)
    p["dec_fc_b"] = jnp.zeros((feat,), jnp.float32)
    p["dec_w1"] = w(ks[5], (A["feat"][2], A["dec1"]["cout"], 3, 3), A["feat"][2] * 9)
    p["dec_b1"] = jnp.zeros((A["dec1"]["cout"],), jnp.float32)
    p["dec_w2"] = w(ks[6], (A["dec1"]["cout"], A["dec2"]["cout"], 3, 3), A["dec1"]["cout"] * 9)
    p["dec_b2"] = jnp.zeros((A["dec2"]["cout"],), jnp.float32)
    return p


def _nchw_to_nhwc_perm(C, H, W):
    """perm[i_nhwc] = i_nchw  (so NHWC-flattened activations hit the same weights
    PyTorch's NCHW flatten would)."""
    h = jnp.arange(H)[:, None, None]
    w = jnp.arange(W)[None, :, None]
    c = jnp.arange(C)[None, None, :]
    return ((c * H + h) * W + w).reshape(-1)


def prepare_params(raw):
    """One-time (outside the traced forward) conversion to kernel-ready layouts:
    transposes, spatial flips, im2col weight matrices, NCHW-flatten permutation,
    lane/K padding and bf16 casts."""
    A = ARCH

    def conv_mat(w_oihw, cin_pad=None):
        Cout, Cin, kh, kw = w_oihw.shape
        if cin_pad is not None and cin_pad > Cin:
            w_oihw = jnp.pad(w_oihw, ((0, 0), (0, cin_pad - Cin), (0, 0), (0, 0)))
            Cin = cin_pad
        m = jnp.transpose(w_oihw, (2, 3, 1, 0)).reshape(kh * kw * Cin, Cout)
        n_pad = _round_up(max(Cout, LANE), LANE)          # lane-dense output slab
        m = jnp.pad(m, ((0, 0), (0, n_pad - Cout)))
        return m.astype(jnp.bfloat16)

    def bias_row(b):
        n = b.shape[0]
        n_pad = _round_up(max(n, LANE), LANE)
        return jnp.pad(b, (0, n_pad - n)).reshape(1, n_pad).astype(jnp.float32)

    def convT_eq(w_iohw):  # ConvT (Cin,Cout,kh,kw) -> equivalent forward conv OIHW
        return jnp.flip(jnp.transpose(w_iohw, (1, 0, 2, 3)), axis=(2, 3))

    fh, fw, fc = A["feat"]
    perm = _nchw_to_nhwc_perm(fc, fh, fw)
    z = A["z_dim"]

    p = {}
    p["enc1_w"] = conv_mat(raw["enc_w1"], cin_pad=A["c_in_pad"])
    p["enc1_b"] = bias_row(raw["enc_b1"])
    p["enc2_w"] = conv_mat(raw["enc_w2"])
    p["enc2_b"] = bias_row(raw["enc_b2"])

    # Encoder head: concat mu/lv weights along the output axis and permute rows so
    # NHWC-flattened features match PyTorch's NCHW flatten order.
    w_head_pt = jnp.concatenate([raw["fc_mu_w"], raw["fc_lv_w"]], axis=0)   # (2Z, 256)
    p["head_w"] = jnp.transpose(w_head_pt[:, perm]).astype(jnp.bfloat16)    # (256, 2Z)
    p["head_b"] = jnp.concatenate([raw["fc_mu_b"], raw["fc_lv_b"]]).reshape(1, 2 * z).astype(jnp.float32)

    # Decoder FC: permute output columns so the kernel writes NHWC order directly.
    p["dec_fc_w"] = jnp.transpose(raw["dec_fc_w"][perm, :]).astype(jnp.bfloat16)  # (Z, 256)
    p["dec_fc_b"] = raw["dec_fc_b"][perm].reshape(1, -1).astype(jnp.float32)

    p["dec1_w"] = conv_mat(convT_eq(raw["dec_w1"]))
    p["dec1_b"] = bias_row(raw["dec_b1"])
    p["dec2_w"] = conv_mat(convT_eq(raw["dec_w2"]))
    p["dec2_b"] = bias_row(raw["dec_b2"])
    return p


# ----------------------------------------------------------------------------
# VAE forward
# ----------------------------------------------------------------------------
def vae_forward(params, x_nchw, eps):
    A = ARCH
    # boundary: NCHW (PyTorch) -> NHWC bf16; pad Cin 4->8 once so K = 9*8 is 8-aligned
    x = jnp.transpose(x_nchw, (0, 2, 3, 1)).astype(jnp.bfloat16)
    if A["c_in_pad"] > A["c_in"]:
        x = jnp.pad(x, ((0, 0), (0, 0), (0, 0), (0, A["c_in_pad"] - A["c_in"])))

    # ---- encoder ----
    h = conv2d_gemm(x, params["enc1_w"], params["enc1_b"], A["enc1"], "relu", jnp.bfloat16)  # (N,8,8,8)
    h = conv2d_gemm(h, params["enc2_w"], params["enc2_b"], A["enc2"], "relu", jnp.bfloat16)  # (N,4,4,16)
    N = h.shape[0]
    h_flat = h.reshape(N, -1)   # NHWC flatten; head weights carry the NCHW permutation

    # ---- fused heads + reparameterize: mu, log_var, z = mu + eps*exp(lv/2) ----
    mu, log_var, z = pallas_enc_head(h_flat, params["head_w"], params["head_b"], eps, A["z_dim"])

    # ---- decoder ----
    d = pallas_linear(z.astype(jnp.bfloat16), params["dec_fc_w"], params["dec_fc_b"],
                      act="relu", out_dtype=jnp.bfloat16)                                    # (N,256)
    fh, fw, fc = A["feat"]
    d = d.reshape(N, fh, fw, fc)                                                             # NHWC directly
    d = conv_transpose2d_gemm(d, params["dec1_w"], params["dec1_b"], A["dec1"],
                              "relu", jnp.bfloat16)                                          # (N,8,8,8)
    out = conv_transpose2d_gemm(d, params["dec2_w"], params["dec2_b"], A["dec2"],
                                "sigmoid", jnp.float32)                                      # (N,16,16,4)
    out_img = jnp.transpose(out, (0, 3, 1, 2))                                               # back to NCHW
    return out_img, mu, log_var


if __name__ == "__main__":
    key = jax.random.PRNGKey(0)
    k_param, k_x, k_eps = jax.random.split(key, 3)

    B, C, H, W = 2, 4, 16, 16
    Z = ARCH["z_dim"]
    x = jax.random.normal(k_x, (B, C, H, W), jnp.float32)
    eps = jax.random.normal(k_eps, (B, Z), jnp.float32)   # torch.randn equivalent, drawn outside

    raw = init_raw_params(k_param)
    params = prepare_params(raw)    # all layout / packing work hoisted out of the hot path

    fwd = jax.jit(vae_forward)
    out_img, mu, log_var = fwd(params, x, eps)
    jax.block_until_ready((out_img, mu, log_var))

    assert out_img.shape == (B, C, H, W)
    assert mu.shape == (B, Z) and log_var.shape == (B, Z)
    assert bool(jnp.all(jnp.isfinite(out_img)))
    assert bool(jnp.all(out_img >= 0.0)) and bool(jnp.all(out_img <= 1.0))
    print("KERNEL_OK")
</pallas_src>

<mosaic_0001>
module attributes {stable_mosaic.version = 11 : i64} {
  func.func @_matmul_bias_act_kernel(%arg0: i32, %arg1: memref<128x72xbf16, #tpu.memory_space<vmem>>, %arg2: memref<72x128xbf16, #tpu.memory_space<vmem>>, %arg3: memref<1x128xf32, #tpu.memory_space<vmem>>, %arg4: memref<128x128xbf16, #tpu.memory_space<vmem>>) attributes {dimension_semantics = [#tpu.dimension_semantics<parallel>], iteration_bounds = array<i64: 1>, scalar_prefetch = 0 : i64, scratch_operands = 0 : i64, tpu.core_type = #tpu.core_type<tc>, window_params = [{transform_indices = @transform_0, window_bounds = array<i64: 128, 72>}, {pipeline_mode = #tpu.pipeline_mode<synchronous>, transform_indices = @transform_1, window_bounds = array<i64: 72, 128>}, {pipeline_mode = #tpu.pipeline_mode<synchronous>, transform_indices = @transform_2, window_bounds = array<i64: 1, 128>}, {transform_indices = @transform_3, window_bounds = array<i64: 128, 128>}]} {
    %c0 = arith.constant 0 : index
    %c0_0 = arith.constant 0 : index
    %0 = vector.load %arg1[%c0, %c0_0] : memref<128x72xbf16, #tpu.memory_space<vmem>>, vector<128x72xbf16>
    %c0_1 = arith.constant 0 : index
    %c0_2 = arith.constant 0 : index
    %1 = vector.load %arg2[%c0_1, %c0_2] : memref<72x128xbf16, #tpu.memory_space<vmem>>, vector<72x128xbf16>
    %cst = arith.constant dense<0.000000e+00> : vector<128x128xf32>
    %2 = tpu.matmul %0, %1, %cst {dimension_numbers = #tpu.dot_dimension_numbers<[1], [0], [0], [1], [0, 0, 1, 1], [], []>} : vector<128x72xbf16>, vector<72x128xbf16>, vector<128x128xf32> -> vector<128x128xf32>
    %c0_3 = arith.constant 0 : index
    %c0_4 = arith.constant 0 : index
    %3 = vector.load %arg3[%c0_3, %c0_4] : memref<1x128xf32, #tpu.memory_space<vmem>>, vector<1x128xf32>
    %4 = vector.broadcast %3 : vector<1x128xf32> to vector<128x128xf32>
    %5 = arith.addf %2, %4 : vector<128x128xf32>
    %cst_5 = arith.constant 0.000000e+00 : f32
    %6 = vector.broadcast %cst_5 : f32 to vector<128x128xf32>
    %7 = arith.maximumf %5, %6 : vector<128x128xf32>
    %8 = arith.truncf %7 : vector<128x128xf32> to vector<128x128xbf16>
    %c0_6 = arith.constant 0 : index
    %c0_7 = arith.constant 0 : index
    %9 = vector.load %arg4[%c0_6, %c0_7] : memref<128x128xbf16, #tpu.memory_space<vmem>>, vector<128x128xbf16>
    tpu.vector_store %arg4[%c0_6, %c0_7], %8 {strides = array<i32>} : memref<128x128xbf16, #tpu.memory_space<vmem>>, vector<128x128xbf16>,
    return
  }
  func.func @transform_0(%arg0: i32) -> (i32, i32) {
    %c0_i32 = arith.constant 0 : i32
    %c0_i32_0 = arith.constant 0 : i32
    return %arg0, %c0_i32 : i32, i32
  }
  func.func @transform_1(%arg0: i32) -> (i32, i32) {
    %c0_i32 = arith.constant 0 : i32
    %c0_i32_0 = arith.constant 0 : i32
    %c0_i32_1 = arith.constant 0 : i32
    return %c0_i32, %c0_i32_0 : i32, i32
  }
  func.func @transform_2(%arg0: i32) -> (i32, i32) {
    %c0_i32 = arith.constant 0 : i32
    %c0_i32_0 = arith.constant 0 : i32
    %c0_i32_1 = arith.constant 0 : i32
    return %c0_i32, %c0_i32_0 : i32, i32
  }
  func.func @transform_3(%arg0: i32) -> (i32, i32) {
    %c0_i32 = arith.constant 0 : i32
    %c0_i32_0 = arith.constant 0 : i32
    return %arg0, %c0_i32 : i32, i32
  }
}

module attributes {stable_mosaic.version = 11 : i64} {
  func.func @_enc_head_kernel(%arg0: i32, %arg1: memref<2x256xbf16, #tpu.memory_space<vmem>>, %arg2: memref<256x64xbf16, #tpu.memory_space<vmem>>, %arg3: memref<1x64xf32, #tpu.memory_space<vmem>>, %arg4: memref<2x32xf32, #tpu.memory_space<vmem>>, %arg5: memref<2x32xf32, #tpu.memory_space<vmem>>, %arg6: memref<2x32xf32, #tpu.memory_space<vmem>>, %arg7: memref<2x32xf32, #tpu.memory_space<vmem>>) attributes {dimension_semantics = [#tpu.dimension_semantics<arbitrary>], iteration_bounds = array<i64: 1>, scalar_prefetch = 0 : i64, scratch_operands = 0 : i64, tpu.core_type = #tpu.core_type<tc>, window_params = [{pipeline_mode = #tpu.pipeline_mode<synchronous>, transform_indices = @transform_0, window_bounds = array<i64: 2, 256>}, {pipeline_mode = #tpu.pipeline_mode<synchronous>, transform_indices = @transform_1, window_bounds = array<i64: 256, 64>}, {pipeline_mode = #tpu.pipeline_mode<synchronous>, transform_indices = @transform_2, window_bounds = array<i64: 1, 64>}, {pipeline_mode = #tpu.pipeline_mode<synchronous>, transform_indices = @transform_3, window_bounds = array<i64: 2, 32>}, {pipeline_mode = #tpu.pipeline_mode<synchronous>, transform_indices = @transform_4, window_bounds = array<i64: 2, 32>}, {pipeline_mode = #tpu.pipeline_mode<synchronous>, transform_indices = @transform_5, window_bounds = array<i64: 2, 32>}, {pipeline_mode = #tpu.pipeline_mode<synchronous>, transform_indices = @transform_6, window_bounds = array<i64: 2, 32>}]} {
    %c0 = arith.constant 0 : index
    %c0_0 = arith.constant 0 : index
    %0 = vector.load %arg1[%c0, %c0_0] : memref<2x256xbf16, #tpu.memory_space<vmem>>, vector<2x256xbf16>
    %c0_1 = arith.constant 0 : index
    %c0_2 = arith.constant 0 : index
    %1 = vector.load %arg2[%c0_1, %c0_2] : memref<256x64xbf16, #tpu.memory_space<vmem>>, vector<256x64xbf16>
    %cst = arith.constant dense<0.000000e+00> : vector<2x64xf32>
    %2 = tpu.matmul %0, %1, %cst {dimension_numbers = #tpu.dot_dimension_numbers<[1], [0], [0], [1], [0, 0, 1, 1], [], []>} : vector<2x256xbf16>, vector<256x64xbf16>, vector<2x64xf32> -> vector<2x64xf32>
    %c0_3 = arith.constant 0 : index
    %c0_4 = arith.constant 0 : index
    %3 = vector.load %arg3[%c0_3, %c0_4] : memref<1x64xf32, #tpu.memory_space<vmem>>, vector<1x64xf32>
    %4 = vector.broadcast %3 : vector<1x64xf32> to vector<2x64xf32>
    %5 = arith.addf %2, %4 : vector<2x64xf32>
    %6 = vector.extract_strided_slice %5 {offsets = [0, 0], sizes = [2, 32], strides = [1, 1]} : vector<2x64xf32> to vector<2x32xf32>
    %7 = vector.extract_strided_slice %5 {offsets = [0, 32], sizes = [2, 32], strides = [1, 1]} : vector<2x64xf32> to vector<2x32xf32>
    %c0_5 = arith.constant 0 : index
    %c0_6 = arith.constant 0 : index
    %8 = vector.load %arg5[%c0_5, %c0_6] : memref<2x32xf32, #tpu.memory_space<vmem>>, vector<2x32xf32>
    tpu.vector_store %arg5[%c0_5, %c0_6], %6 {strides = array<i32>} : memref<2x32xf32, #tpu.memory_space<vmem>>, vector<2x32xf32>,
    %c0_7 = arith.constant 0 : index
    %c0_8 = arith.constant 0 : index
    %9 = vector.load %arg6[%c0_7, %c0_8] : memref<2x32xf32, #tpu.memory_space<vmem>>, vector<2x32xf32>
    tpu.vector_store %arg6[%c0_7, %c0_8], %7 {strides = array<i32>} : memref<2x32xf32, #tpu.memory_space<vmem>>, vector<2x32xf32>,
    %c0_9 = arith.constant 0 : index
    %c0_10 = arith.constant 0 : index
    %10 = vector.load %arg4[%c0_9, %c0_10] : memref<2x32xf32, #tpu.memory_space<vmem>>, vector<2x32xf32>
    %cst_11 = arith.constant 5.000000e-01 : f32
    %11 = vector.broadcast %cst_11 : f32 to vector<2x32xf32>
    %12 = arith.mulf %7, %11 : vector<2x32xf32>
    %13 = math.exp %12 : vector<2x32xf32>
    %14 = arith.mulf %10, %13 : vector<2x32xf32>
    %15 = arith.addf %6, %14 : vector<2x32xf32>
    %c0_12 = arith.constant 0 : index
    %c0_13 = arith.constant 0 : index
    %16 = vector.load %arg7[%c0_12, %c0_13] : memref<2x32xf32, #tpu.memory_space<vmem>>, vector<2x32xf32>
    tpu.vector_store %arg7[%c0_12, %c0_13], %15 {strides = array<i32>} : memref<2x32xf32, #tpu.memory_space<vmem>>, vector<2x32xf32>,
    return
  }
  func.func @transform_0(%arg0: i32) -> (i32, i32) {
    %c0_i32 = arith.constant 0 : i32
    %c0_i32_0 = arith.constant 0 : i32
    %c0_i32_1 = arith.constant 0 : i32
    return %c0_i32, %c0_i32_0 : i32, i32
  }
  func.func @transform_1(%arg0: i32) -> (i32, i32) {
    %c0_i32 = arith.constant 0 : i32
    %c0_i32_0 = arith.constant 0 : i32
    %c0_i32_1 = arith.constant 0 : i32
    return %c0_i32, %c0_i32_0 : i32, i32
  }
  func.func @transform_2(%arg0: i32) -> (i32, i32) {
    %c0_i32 = arith.constant 0 : i32
    %c0_i32_0 = arith.constant 0 : i32
    %c0_i32_1 = arith.constant 0 : i32
    return %c0_i32, %c0_i32_0 : i32, i32
  }
  func.func @transform_3(%arg0: i32) -> (i32, i32) {
    %c0_i32 = arith.constant 0 : i32
    %c0_i32_0 = arith.constant 0 : i32
    %c0_i32_1 = arith.constant 0 : i32
    return %c0_i32, %c0_i32_0 : i32, i32
  }
  func.func @transform_4(%arg0: i32) -> (i32, i32) {
    %c0_i32 = arith.constant 0 : i32
    %c0_i32_0 = arith.constant 0 : i32
    %c0_i32_1 = arith.constant 0 : i32
    return %c0_i32, %c0_i32_0 : i32, i32
  }
  func.func @transform_5(%arg0: i32) -> (i32, i32) {
    %c0_i32 = arith.constant 0 : i32
    %c0_i32_0 = arith.constant 0 : i32
    %c0_i32_1 = arith.constant 0 : i32
    return %c0_i32, %c0_i32_0 : i32, i32
  }
  func.func @transform_6(%arg0: i32) -> (i32, i32) {
    %c0_i32 = arith.constant 0 : i32
    %c0_i32_0 = arith.constant 0 : i32
    %c0_i32_1 = arith.constant 0 : i32
    return %c0_i32, %c0_i32_0 : i32, i32
  }
}

module attributes {stable_mosaic.version = 11 : i64} {
  func.func @_matmul_bias_act_kernel(%arg0: i32, %arg1: memref<32x72xbf16, #tpu.memory_space<vmem>>, %arg2: memref<72x128xbf16, #tpu.memory_space<vmem>>, %arg3: memref<1x128xf32, #tpu.memory_space<vmem>>, %arg4: memref<32x128xbf16, #tpu.memory_space<vmem>>) attributes {dimension_semantics = [#tpu.dimension_semantics<parallel>], iteration_bounds = array<i64: 1>, scalar_prefetch = 0 : i64, scratch_operands = 0 : i64, tpu.core_type = #tpu.core_type<tc>, window_params = [{transform_indices = @transform_0, window_bounds = array<i64: 32, 72>}, {pipeline_mode = #tpu.pipeline_mode<synchronous>, transform_indices = @transform_1, window_bounds = array<i64: 72, 128>}, {pipeline_mode = #tpu.pipeline_mode<synchronous>, transform_indices = @transform_2, window_bounds = array<i64: 1, 128>}, {transform_indices = @transform_3, window_bounds = array<i64: 32, 128>}]} {
    %c0 = arith.constant 0 : index
    %c0_0 = arith.constant 0 : index
    %0 = vector.load %arg1[%c0, %c0_0] : memref<32x72xbf16, #tpu.memory_space<vmem>>, vector<32x72xbf16>
    %c0_1 = arith.constant 0 : index
    %c0_2 = arith.constant 0 : index
    %1 = vector.load %arg2[%c0_1, %c0_2] : memref<72x128xbf16, #tpu.memory_space<vmem>>, vector<72x128xbf16>
    %cst = arith.constant dense<0.000000e+00> : vector<32x128xf32>
    %2 = tpu.matmul %0, %1, %cst {dimension_numbers = #tpu.dot_dimension_numbers<[1], [0], [0], [1], [0, 0, 1, 1], [], []>} : vector<32x72xbf16>, vector<72x128xbf16>, vector<32x128xf32> -> vector<32x128xf32>
    %c0_3 = arith.constant 0 : index
    %c0_4 = arith.constant 0 : index
    %3 = vector.load %arg3[%c0_3, %c0_4] : memref<1x128xf32, #tpu.memory_space<vmem>>, vector<1x128xf32>
    %4 = vector.broadcast %3 : vector<1x128xf32> to vector<32x128xf32>
    %5 = arith.addf %2, %4 : vector<32x128xf32>
    %cst_5 = arith.constant 0.000000e+00 : f32
    %6 = vector.broadcast %cst_5 : f32 to vector<32x128xf32>
    %7 = arith.maximumf %5, %6 : vector<32x128xf32>
    %8 = arith.truncf %7 : vector<32x128xf32> to vector<32x128xbf16>
    %c0_6 = arith.constant 0 : index
    %c0_7 = arith.constant 0 : index
    %9 = vector.load %arg4[%c0_6, %c0_7] : memref<32x128xbf16, #tpu.memory_space<vmem>>, vector<32x128xbf16>
    tpu.vector_store %arg4[%c0_6, %c0_7], %8 {strides = array<i32>} : memref<32x128xbf16, #tpu.memory_space<vmem>>, vector<32x128xbf16>,
    return
  }
  func.func @transform_0(%arg0: i32) -> (i32, i32) {
    %c0_i32 = arith.constant 0 : i32
    %c0_i32_0 = arith.constant 0 : i32
    return %arg0, %c0_i32 : i32, i32
  }
  func.func @transform_1(%arg0: i32) -> (i32, i32) {
    %c0_i32 = arith.constant 0 : i32
    %c0_i32_0 = arith.constant 0 : i32
    %c0_i32_1 = arith.constant 0 : i32
    return %c0_i32, %c0_i32_0 : i32, i32
  }
  func.func @transform_2(%arg0: i32) -> (i32, i32) {
    %c0_i32 = arith.constant 0 : i32
    %c0_i32_0 = arith.constant 0 : i32
    %c0_i32_1 = arith.constant 0 : i32
    return %c0_i32, %c0_i32_0 : i32, i32
  }
  func.func @transform_3(%arg0: i32) -> (i32, i32) {
    %c0_i32 = arith.constant 0 : i32
    %c0_i32_0 = arith.constant 0 : i32
    return %arg0, %c0_i32 : i32, i32
  }
}

module attributes {stable_mosaic.version = 11 : i64} {
  func.func @_matmul_bias_act_kernel(%arg0: i32, %arg1: memref<2x32xbf16, #tpu.memory_space<vmem>>, %arg2: memref<32x256xbf16, #tpu.memory_space<vmem>>, %arg3: memref<1x256xf32, #tpu.memory_space<vmem>>, %arg4: memref<2x256xbf16, #tpu.memory_space<vmem>>) attributes {dimension_semantics = [#tpu.dimension_semantics<parallel>], iteration_bounds = array<i64: 1>, scalar_prefetch = 0 : i64, scratch_operands = 0 : i64, tpu.core_type = #tpu.core_type<tc>, window_params = [{transform_indices = @transform_0, window_bounds = array<i64: 2, 32>}, {pipeline_mode = #tpu.pipeline_mode<synchronous>, transform_indices = @transform_1, window_bounds = array<i64: 32, 256>}, {pipeline_mode = #tpu.pipeline_mode<synchronous>, transform_indices = @transform_2, window_bounds = array<i64: 1, 256>}, {transform_indices = @transform_3, window_bounds = array<i64: 2, 256>}]} {
    %c0 = arith.constant 0 : index
    %c0_0 = arith.constant 0 : index
    %0 = vector.load %arg1[%c0, %c0_0] : memref<2x32xbf16, #tpu.memory_space<vmem>>, vector<2x32xbf16>
    %c0_1 = arith.constant 0 : index
    %c0_2 = arith.constant 0 : index
    %1 = vector.load %arg2[%c0_1, %c0_2] : memref<32x256xbf16, #tpu.memory_space<vmem>>, vector<32x256xbf16>
    %cst = arith.constant dense<0.000000e+00> : vector<2x256xf32>
    %2 = tpu.matmul %0, %1, %cst {dimension_numbers = #tpu.dot_dimension_numbers<[1], [0], [0], [1], [0, 0, 1, 1], [], []>} : vector<2x32xbf16>, vector<32x256xbf16>, vector<2x256xf32> -> vector<2x256xf32>
    %c0_3 = arith.constant 0 : index
    %c0_4 = arith.constant 0 : index
    %3 = vector.load %arg3[%c0_3, %c0_4] : memref<1x256xf32, #tpu.memory_space<vmem>>, vector<1x256xf32>
    %4 = vector.broadcast %3 : vector<1x256xf32> to vector<2x256xf32>
    %5 = arith.addf %2, %4 : vector<2x256xf32>
    %cst_5 = arith.constant 0.000000e+00 : f32
    %6 = vector.broadcast %cst_5 : f32 to vector<2x256xf32>
    %7 = arith.maximumf %5, %6 : vector<2x256xf32>
    %8 = arith.truncf %7 : vector<2x256xf32> to vector<2x256xbf16>
    %c0_6 = arith.constant 0 : index
    %c0_7 = arith.constant 0 : index
    %9 = vector.load %arg4[%c0_6, %c0_7] : memref<2x256xbf16, #tpu.memory_space<vmem>>, vector<2x256xbf16>
    tpu.vector_store %arg4[%c0_6, %c0_7], %8 {strides = array<i32>} : memref<2x256xbf16, #tpu.memory_space<vmem>>, vector<2x256xbf16>,
    return
  }
  func.func @transform_0(%arg0: i32) -> (i32, i32) {
    %c0_i32 = arith.constant 0 : i32
    %c0_i32_0 = arith.constant 0 : i32
    return %arg0, %c0_i32 : i32, i32
  }
  func.func @transform_1(%arg0: i32) -> (i32, i32) {
    %c0_i32 = arith.constant 0 : i32
    %c0_i32_0 = arith.constant 0 : i32
    %c0_i32_1 = arith.constant 0 : i32
    return %c0_i32, %c0_i32_0 : i32, i32
  }
  func.func @transform_2(%arg0: i32) -> (i32, i32) {
    %c0_i32 = arith.constant 0 : i32
    %c0_i32_0 = arith.constant 0 : i32
    %c0_i32_1 = arith.constant 0 : i32
    return %c0_i32, %c0_i32_0 : i32, i32
  }
  func.func @transform_3(%arg0: i32) -> (i32, i32) {
    %c0_i32 = arith.constant 0 : i32
    %c0_i32_0 = arith.constant 0 : i32
    return %arg0, %c0_i32 : i32, i32
  }
}

module attributes {stable_mosaic.version = 11 : i64} {
  func.func @_matmul_bias_act_kernel(%arg0: i32, %arg1: memref<128x144xbf16, #tpu.memory_space<vmem>>, %arg2: memref<144x128xbf16, #tpu.memory_space<vmem>>, %arg3: memref<1x128xf32, #tpu.memory_space<vmem>>, %arg4: memref<128x128xbf16, #tpu.memory_space<vmem>>) attributes {dimension_semantics = [#tpu.dimension_semantics<parallel>], iteration_bounds = array<i64: 1>, scalar_prefetch = 0 : i64, scratch_operands = 0 : i64, tpu.core_type = #tpu.core_type<tc>, window_params = [{transform_indices = @transform_0, window_bounds = array<i64: 128, 144>}, {pipeline_mode = #tpu.pipeline_mode<synchronous>, transform_indices = @transform_1, window_bounds = array<i64: 144, 128>}, {pipeline_mode = #tpu.pipeline_mode<synchronous>, transform_indices = @transform_2, window_bounds = array<i64: 1, 128>}, {transform_indices = @transform_3, window_bounds = array<i64: 128, 128>}]} {
    %c0 = arith.constant 0 : index
    %c0_0 = arith.constant 0 : index
    %0 = vector.load %arg1[%c0, %c0_0] : memref<128x144xbf16, #tpu.memory_space<vmem>>, vector<128x144xbf16>
    %c0_1 = arith.constant 0 : index
    %c0_2 = arith.constant 0 : index
    %1 = vector.load %arg2[%c0_1, %c0_2] : memref<144x128xbf16, #tpu.memory_space<vmem>>, vector<144x128xbf16>
    %cst = arith.constant dense<0.000000e+00> : vector<128x128xf32>
    %2 = tpu.matmul %0, %1, %cst {dimension_numbers = #tpu.dot_dimension_numbers<[1], [0], [0], [1], [0, 0, 1, 1], [], []>} : vector<128x144xbf16>, vector<144x128xbf16>, vector<128x128xf32> -> vector<128x128xf32>
    %c0_3 = arith.constant 0 : index
    %c0_4 = arith.constant 0 : index
    %3 = vector.load %arg3[%c0_3, %c0_4] : memref<1x128xf32, #tpu.memory_space<vmem>>, vector<1x128xf32>
    %4 = vector.broadcast %3 : vector<1x128xf32> to vector<128x128xf32>
    %5 = arith.addf %2, %4 : vector<128x128xf32>
    %cst_5 = arith.constant 0.000000e+00 : f32
    %6 = vector.broadcast %cst_5 : f32 to vector<128x128xf32>
    %7 = arith.maximumf %5, %6 : vector<128x128xf32>
    %8 = arith.truncf %7 : vector<128x128xf32> to vector<128x128xbf16>
    %c0_6 = arith.constant 0 : index
    %c0_7 = arith.constant 0 : index
    %9 = vector.load %arg4[%c0_6, %c0_7] : memref<128x128xbf16, #tpu.memory_space<vmem>>, vector<128x128xbf16>
    tpu.vector_store %arg4[%c0_6, %c0_7], %8 {strides = array<i32>} : memref<128x128xbf16, #tpu.memory_space<vmem>>, vector<128x128xbf16>,
    return
  }
  func.func @transform_0(%arg0: i32) -> (i32, i32) {
    %c0_i32 = arith.constant 0 : i32
    %c0_i32_0 = arith.constant 0 : i32
    return %arg0, %c0_i32 : i32, i32
  }
  func.func @transform_1(%arg0: i32) -> (i32, i32) {
    %c0_i32 = arith.constant 0 : i32
    %c0_i32_0 = arith.constant 0 : i32
    %c0_i32_1 = arith.constant 0 : i32
    return %c0_i32, %c0_i32_0 : i32, i32
  }
  func.func @transform_2(%arg0: i32) -> (i32, i32) {
    %c0_i32 = arith.constant 0 : i32
    %c0_i32_0 = arith.constant 0 : i32
    %c0_i32_1 = arith.constant 0 : i32
    return %c0_i32, %c0_i32_0 : i32, i32
  }
  func.func @transform_3(%arg0: i32) -> (i32, i32) {
    %c0_i32 = arith.constant 0 : i32
    %c0_i32_0 = arith.constant 0 : i32
    return %arg0, %c0_i32 : i32, i32
  }
}

module attributes {stable_mosaic.version = 11 : i64} {
  func.func @_matmul_bias_act_kernel(%arg0: i32, %arg1: memref<256x72xbf16, #tpu.memory_space<vmem>>, %arg2: memref<72x128xbf16, #tpu.memory_space<vmem>>, %arg3: memref<1x128xf32, #tpu.memory_space<vmem>>, %arg4: memref<256x128xf32, #tpu.memory_space<vmem>>) attributes {dimension_semantics = [#tpu.dimension_semantics<parallel>], iteration_bounds = array<i64: 2>, scalar_prefetch = 0 : i64, scratch_operands = 0 : i64, tpu.core_type = #tpu.core_type<tc>, window_params = [{transform_indices = @transform_0, window_bounds = array<i64: 256, 72>}, {pipeline_mode = #tpu.pipeline_mode<synchronous>, transform_indices = @transform_1, window_bounds = array<i64: 72, 128>}, {pipeline_mode = #tpu.pipeline_mode<synchronous>, transform_indices = @transform_2, window_bounds = array<i64: 1, 128>}, {transform_indices = @transform_3, window_bounds = array<i64: 256, 128>}]} {
    %c0 = arith.constant 0 : index
    %c0_0 = arith.constant 0 : index
    %0 = vector.load %arg1[%c0, %c0_0] : memref<256x72xbf16, #tpu.memory_space<vmem>>, vector<256x72xbf16>
    %c0_1 = arith.constant 0 : index
    %c0_2 = arith.constant 0 : index
    %1 = vector.load %arg2[%c0_1, %c0_2] : memref<72x128xbf16, #tpu.memory_space<vmem>>, vector<72x128xbf16>
    %cst = arith.constant dense<0.000000e+00> : vector<256x128xf32>
    %2 = tpu.matmul %0, %1, %cst {dimension_numbers = #tpu.dot_dimension_numbers<[1], [0], [0], [1], [0, 0, 1, 1], [], []>} : vector<256x72xbf16>, vector<72x128xbf16>, vector<256x128xf32> -> vector<256x128xf32>
    %c0_3 = arith.constant 0 : index
    %c0_4 = arith.constant 0 : index
    %3 = vector.load %arg3[%c0_3, %c0_4] : memref<1x128xf32, #tpu.memory_space<vmem>>, vector<1x128xf32>
    %4 = vector.broadcast %3 : vector<1x128xf32> to vector<256x128xf32>
    %5 = arith.addf %2, %4 : vector<256x128xf32>
    %6 = arith.negf %5 : vector<256x128xf32>
    %7 = math.exp %6 : vector<256x128xf32>
    %cst_5 = arith.constant 1.000000e+00 : f32
    %8 = vector.broadcast %cst_5 : f32 to vector<256x128xf32>
    %9 = arith.addf %8, %7 : vector<256x128xf32>
    %10 = arith.divf %8, %9 : vector<256x128xf32>
    %c0_6 = arith.constant 0 : index
    %c0_7 = arith.constant 0 : index
    %11 = vector.load %arg4[%c0_6, %c0_7] : memref<256x128xf32, #tpu.memory_space<vmem>>, vector<256x128xf32>
    tpu.vector_store %arg4[%c0_6, %c0_7], %10 {strides = array<i32>} : memref<256x128xf32, #tpu.memory_space<vmem>>, vector<256x128xf32>,
    return
  }
  func.func @transform_0(%arg0: i32) -> (i32, i32) {
    %c0_i32 = arith.constant 0 : i32
    %c0_i32_0 = arith.constant 0 : i32
    return %arg0, %c0_i32 : i32, i32
  }
  func.func @transform_1(%arg0: i32) -> (i32, i32) {
    %c0_i32 = arith.constant 0 : i32
    %c0_i32_0 = arith.constant 0 : i32
    %c0_i32_1 = arith.constant 0 : i32
    return %c0_i32, %c0_i32_0 : i32, i32
  }
  func.func @transform_2(%arg0: i32) -> (i32, i32) {
    %c0_i32 = arith.constant 0 : i32
    %c0_i32_0 = arith.constant 0 : i32
    %c0_i32_1 = arith.constant 0 : i32
    return %c0_i32, %c0_i32_0 : i32, i32
  }
  func.func @transform_3(%arg0: i32) -> (i32, i32) {
    %c0_i32 = arith.constant 0 : i32
    %c0_i32_0 = arith.constant 0 : i32
    return %arg0, %c0_i32 : i32, i32
  }
}

</mosaic_0001>

<llo_original>
// kernel: vae_forward.6
$region0: #{vae_forward.6}
  #allocation0 [shape = 'u32[]', space=smem, size = 0x4, offset = 0x4, fixed_abs, tag = 'smem constant byte address 0x4 - core index']
  #allocation1 [shape = 'u32[72,128]{1,0:T(1,128)}', space=vmem, size = 0x9000, scoped, tag = 'internal scratch']
  %s0 = inlined_call_operand.vmem [shape: bf16[128,72], index: 0, kind: input, shape index: {}]
  %s1 = inlined_call_operand.vmem [shape: bf16[72,128], index: 1, kind: input, shape index: {}]
  %s2 = inlined_call_operand.vmem [shape: f32[1,128], index: 2, kind: input, shape index: {}]
  %s3 = inlined_call_operand.vmem [shape: bf16[128,128], index: 3, kind: output, shape index: {}]
  %s4 = sld [smem:[#allocation0]]
  $region22: #{vae_forward.6} parent=0
    _
  %s6 = ssub.s32 1, %s4
  %s7 = scalar_select 0, %s6, %s4
  // Predicated region
  $region2: #{vae_forward.6} parent=0 // pred_check
    _
  $region3: #{vae_forward.6} parent=0 // pred_check_branch
    %9 = sbr.rel (0) target = $region5
  $region4: #{vae_forward.6} parent=0 // pred_region
    _
  $region5: #{vae_forward.6} parent=0 // pred_fallthru
    _
  // Predicated region
  $region6: #{vae_forward.6} parent=0 // pred_check
    _
  $region7: #{vae_forward.6} parent=0 // pred_check_branch
    %11 = sbr.rel (0) target = $region9
  $region8: #{vae_forward.6} parent=0 // pred_region
    _
  $region9: #{vae_forward.6} parent=0 // pred_fallthru
    _
  // Predicated region
  $region10: #{vae_forward.6} parent=0 // pred_check
    _
  $region11: #{vae_forward.6} parent=0 // pred_check_branch
    %13 = sbr.rel (0) target = $region13
  $region12: #{vae_forward.6} parent=0 // pred_region
    _
  $region13: #{vae_forward.6} parent=0 // pred_fallthru
    _
  %v15 = vld [vmem:[%s0] sm:$0xf]
  %v16 = vld [vmem:[%s0 + $0x4] sm:$0xf]
  %v17 = vld [vmem:[%s0 + $0x8] sm:$0xf]
  %v18 = vld [vmem:[%s0 + $0xc] sm:$0xf]
  %v19 = vld [vmem:[%s0 + $0x10] sm:$0xf]
  %v20 = vld [vmem:[%s0 + $0x14] sm:$0xf]
  %v21 = vld [vmem:[%s0 + $0x18] sm:$0xf]
  %v22 = vld [vmem:[%s0 + $0x1c] sm:$0xf]
  %v23 = vld [vmem:[%s0 + $0x20] sm:$0xf]
  %v24 = vld [vmem:[%s0 + $0x24] sm:$0xf]
  %v25 = vld [vmem:[%s0 + $0x28] sm:$0xf]
  %v26 = vld [vmem:[%s0 + $0x2c] sm:$0xf]
  %v27 = vld [vmem:[%s0 + $0x30] sm:$0xf]
  %v28 = vld [vmem:[%s0 + $0x34] sm:$0xf]
  %v29 = vld [vmem:[%s0 + $0x38] sm:$0xf]
  %v30 = vld [vmem:[%s0 + $0x3c] sm:$0xf]
  %v31 = vld [vmem:[%s1] sm:$0xf]
  %v32 = vld [vmem:[%s1 + $0x4] sm:$0xf]
  %v33 = vld [vmem:[%s1 + $0x8] sm:$0xf]
  %v34 = vld [vmem:[%s1 + $0xc] sm:$0xf]
  %v35 = vld [vmem:[%s1 + $0x10] sm:$0xf]
  %v36 = vld [vmem:[%s1 + $0x14] sm:$0xf]
  %v37 = vld [vmem:[%s1 + $0x18] sm:$0xf]
  %v38 = vld [vmem:[%s1 + $0x1c] sm:$0xf]
  %v39 = vld [vmem:[%s1 + $0x20] sm:$0xf]
  %v40 = vld [vmem:[%s2] sm:$0x1]
  %v42 = vperm.slane %v40, 0
  %v60 = vunpack.c.l.b16 %v15
  %v61 = vunpack.c.l.b16 %v16
  %v62 = vunpack.c.l.b16 %v17
  %v63 = vunpack.c.l.b16 %v18
  %v64 = vunpack.c.l.b16 %v19
  %v65 = vunpack.c.l.b16 %v20
  %v66 = vunpack.c.l.b16 %v21
  %v67 = vunpack.c.l.b16 %v22
  %v68 = vunpack.c.l.b16 %v23
  %v69 = vunpack.c.l.b16 %v24
  %v70 = vunpack.c.l.b16 %v25
  %v71 = vunpack.c.l.b16 %v26
  %v72 = vunpack.c.l.b16 %v27
  %v73 = vunpack.c.l.b16 %v28
  %v74 = vunpack.c.l.b16 %v29
  %v75 = vunpack.c.l.b16 %v30
  %v76 = vpack.c.b16 %v61, %v60
  %v77 = vpack.c.b16 %v63, %v62
  %v78 = vpack.c.b16 %v65, %v64
  %v79 = vpack.c.b16 %v67, %v66
  %v80 = vpack.c.b16 %v69, %v68
  %v81 = vpack.c.b16 %v71, %v70
  %v82 = vpack.c.b16 %v73, %v72
  %v83 = vpack.c.b16 %v75, %v74
  %v93 = vunpack.c.l.b16 %v31
  %v94 = vunpack.c.l.b16 %v32
  %v95 = vunpack.c.l.b16 %v33
  %v96 = vunpack.c.l.b16 %v34
  %v97 = vunpack.c.l.b16 %v35
  %v98 = vunpack.c.l.b16 %v36
  %v99 = vunpack.c.l.b16 %v37
  %v100 = vunpack.c.l.b16 %v38
  %v101 = vunpack.c.l.b16 %v39
  %v102 = vpack.c.b16 %v94, %v93
  %v103 = vpack.c.b16 %v96, %v95
  %v104 = vpack.c.b16 %v98, %v97
  %v105 = vpack.c.b16 %v100, %v99
  %v106 = vpack.c.b16 %v101, %v101
  %vm111 = vcmask 588800
  %v113 = vsel %vm111, %v76, 0
  %v116 = vsel %vm111, %v77, 0
  %v119 = vsel %vm111, %v78, 0
  %v122 = vsel %vm111, %v79, 0
  %v125 = vsel %vm111, %v80, 0
  %v128 = vsel %vm111, %v81, 0
  %v131 = vsel %vm111, %v82, 0
  %v134 = vsel %vm111, %v83, 0
  %vm136 = vcmask 1043456
  %v138 = vsel %vm136, %v106, 0
  %140 = vmatpush.bf16.msra.mxu0 0
  %141 = vmatpush.bf16.msra.mxu0 0
  %142 = vmatpush.bf16.msra.mxu0 0
  %143 = vmatpush.bf16.msra.mxu0 %v138
  %144 = vmatpush.bf16.msra.mxu0 %v105
  %145 = vmatpush.bf16.msra.mxu0 %v104
  %146 = vmatpush.bf16.msra.mxu0 %v103
  %147 = vmatpush.bf16.msra.mxu0 %v102
  %148 = vmatmul.bf16.gmra.mxu0 %v113
  %v149 = vpop.f32.mrf.mxu0
  %v150 = vadd.f32 %v42, %v149
  %v151 = vpop.f32.mrf.mxu0
  %v152 = vadd.f32 %v42, %v151
  %153 = vmatmul.bf16.gmra.mxu0 %v116
  %v154 = vpop.f32.mrf.mxu0
  %v155 = vadd.f32 %v42, %v154
  %v156 = vpop.f32.mrf.mxu0
  %v157 = vadd.f32 %v42, %v156
  %158 = vmatmul.bf16.gmra.mxu0 %v119
  %v159 = vpop.f32.mrf.mxu0
  %v160 = vadd.f32 %v42, %v159
  %v161 = vpop.f32.mrf.mxu0
  %v162 = vadd.f32 %v42, %v161
  %163 = vmatmul.bf16.gmra.mxu0 %v122
  %v164 = vpop.f32.mrf.mxu0
  %v165 = vadd.f32 %v42, %v164
  %v166 = vpop.f32.mrf.mxu0
  %v167 = vadd.f32 %v42, %v166
  %168 = vmatmul.bf16.gmra.mxu0 %v125
  %v169 = vpop.f32.mrf.mxu0
  %v170 = vadd.f32 %v42, %v169
  %v171 = vpop.f32.mrf.mxu0
  %v172 = vadd.f32 %v42, %v171
  %173 = vmatmul.bf16.gmra.mxu0 %v128
  %v174 = vpop.f32.mrf.mxu0
  %v175 = vadd.f32 %v42, %v174
  %v176 = vpop.f32.mrf.mxu0
  %v177 = vadd.f32 %v42, %v176
  %178 = vmatmul.bf16.gmra.mxu0 %v131
  %v179 = vpop.f32.mrf.mxu0
  %v180 = vadd.f32 %v42, %v179
  %v181 = vpop.f32.mrf.mxu0
  %v182 = vadd.f32 %v42, %v181
  %183 = vmatmul.bf16.gmra.mxu0 %v134
  %v184 = vpop.f32.mrf.mxu0
  %v185 = vadd.f32 %v42, %v184
  %v186 = vpop.f32.mrf.mxu0
  %v187 = vadd.f32 %v42, %v186
  %188 = vdwg.mxu0
  %v189 = vmax.f32 %v150, 0.0
  %v190 = vmax.f32 %v152, 0.0
  %v191 = vmax.f32 %v155, 0.0
  %v192 = vmax.f32 %v157, 0.0
  %v193 = vmax.f32 %v160, 0.0
  %v194 = vmax.f32 %v162, 0.0
  %v195 = vmax.f32 %v165, 0.0
  %v196 = vmax.f32 %v167, 0.0
  %v197 = vmax.f32 %v170, 0.0
  %v198 = vmax.f32 %v172, 0.0
  %v199 = vmax.f32 %v175, 0.0
  %v200 = vmax.f32 %v177, 0.0
  %v201 = vmax.f32 %v180, 0.0
  %v202 = vmax.f32 %v182, 0.0
  %v203 = vmax.f32 %v185, 0.0
  %v204 = vmax.f32 %v187, 0.0
  %v205 = vpack.c.bf16 %v189, %v189
  %v206 = vpack.c.bf16 %v190, %v190
  %v207 = vpack.c.bf16 %v191, %v191
  %v208 = vpack.c.bf16 %v192, %v192
  %v209 = vpack.c.bf16 %v193, %v193
  %v210 = vpack.c.bf16 %v194, %v194
  %v211 = vpack.c.bf16 %v195, %v195
  %v212 = vpack.c.bf16 %v196, %v196
  %v213 = vpack.c.bf16 %v197, %v197
  %v214 = vpack.c.bf16 %v198, %v198
  %v215 = vpack.c.bf16 %v199, %v199
  %v216 = vpack.c.bf16 %v200, %v200
  %v217 = vpack.c.bf16 %v201, %v201
  %v218 = vpack.c.bf16 %v202, %v202
  %v219 = vpack.c.bf16 %v203, %v203
  %v220 = vpack.c.bf16 %v204, %v204
  %221 = vst [vmem:[%s3] sm:$0xf] %v205
  %222 = vst [vmem:[%s3 + $0x4] sm:$0xf] %v206
  %223 = vst [vmem:[%s3 + $0x8] sm:$0xf] %v207
  %224 = vst [vmem:[%s3 + $0xc] sm:$0xf] %v208
  %225 = vst [vmem:[%s3 + $0x10] sm:$0xf] %v209
  %226 = vst [vmem:[%s3 + $0x14] sm:$0xf] %v210
  %227 = vst [vmem:[%s3 + $0x18] sm:$0xf] %v211
  %228 = vst [vmem:[%s3 + $0x1c] sm:$0xf] %v212
  %229 = vst [vmem:[%s3 + $0x20] sm:$0xf] %v213
  %230 = vst [vmem:[%s3 + $0x24] sm:$0xf] %v214
  %231 = vst [vmem:[%s3 + $0x28] sm:$0xf] %v215
  %232 = vst [vmem:[%s3 + $0x2c] sm:$0xf] %v216
  %233 = vst [vmem:[%s3 + $0x30] sm:$0xf] %v217
  %234 = vst [vmem:[%s3 + $0x34] sm:$0xf] %v218
  %235 = vst [vmem:[%s3 + $0x38] sm:$0xf] %v219
  %236 = vst [vmem:[%s3 + $0x3c] sm:$0xf] %v220
  // Predicated region
  $region14: #{vae_forward.6} parent=0 // pred_check
    _
  $region15: #{vae_forward.6} parent=0 // pred_check_branch
    %238 = sbr.rel (0) target = $region17
  $region16: #{vae_forward.6} parent=0 // pred_region
    _
  $region17: #{vae_forward.6} parent=0 // pred_fallthru
    _
  // Predicated region
  $region18: #{vae_forward.6} parent=0 // pred_check
    _
  $region19: #{vae_forward.6} parent=0 // pred_check_branch
    %240 = sbr.rel (0) target = $region21
  $region20: #{vae_forward.6} parent=0 // pred_region
    _
  $region21: #{vae_forward.6} parent=0 // pred_fallthru
    _

// kernel: vae_forward.7
$region0: #{vae_forward.7}
  #allocation0 [shape = 'u32[]', space=smem, size = 0x4, offset = 0x4, fixed_abs, tag = 'smem constant byte address 0x4 - core index']
  #allocation1 [shape = 'u32[72,128]{1,0:T(1,128)}', space=vmem, size = 0x9000, scoped, tag = 'internal scratch']
  %s0 = inlined_call_operand.vmem [shape: bf16[32,72], index: 0, kind: input, shape index: {}]
  %s1 = inlined_call_operand.vmem [shape: bf16[72,128], index: 1, kind: input, shape index: {}]
  %s2 = inlined_call_operand.vmem [shape: f32[1,128], index: 2, kind: input, shape index: {}]
  %s3 = inlined_call_operand.vmem [shape: bf16[32,128], index: 3, kind: output, shape index: {}]
  %s4 = sld [smem:[#allocation0]]
  $region22: #{vae_forward.7} parent=0
    _
  %s6 = ssub.s32 1, %s4
  %s7 = scalar_select 0, %s6, %s4
  // Predicated region
  $region2: #{vae_forward.7} parent=0 // pred_check
    _
  $region3: #{vae_forward.7} parent=0 // pred_check_branch
    %9 = sbr.rel (0) target = $region5
  $region4: #{vae_forward.7} parent=0 // pred_region
    _
  $region5: #{vae_forward.7} parent=0 // pred_fallthru
    _
  // Predicated region
  $region6: #{vae_forward.7} parent=0 // pred_check
    _
  $region7: #{vae_forward.7} parent=0 // pred_check_branch
    %11 = sbr.rel (0) target = $region9
  $region8: #{vae_forward.7} parent=0 // pred_region
    _
  $region9: #{vae_forward.7} parent=0 // pred_fallthru
    _
  // Predicated region
  $region10: #{vae_forward.7} parent=0 // pred_check
    _
  $region11: #{vae_forward.7} parent=0 // pred_check_branch
    %13 = sbr.rel (0) target = $region13
  $region12: #{vae_forward.7} parent=0 // pred_region
    _
  $region13: #{vae_forward.7} parent=0 // pred_fallthru
    _
  %v15 = vld [vmem:[%s0] sm:$0xf]
  %v16 = vld [vmem:[%s0 + $0x4] sm:$0xf]
  %v17 = vld [vmem:[%s0 + $0x8] sm:$0xf]
  %v18 = vld [vmem:[%s0 + $0xc] sm:$0xf]
  %v19 = vld [vmem:[%s1] sm:$0xf]
  %v20 = vld [vmem:[%s1 + $0x4] sm:$0xf]
  %v21 = vld [vmem:[%s1 + $0x8] sm:$0xf]
  %v22 = vld [vmem:[%s1 + $0xc] sm:$0xf]
  %v23 = vld [vmem:[%s1 + $0x10] sm:$0xf]
  %v24 = vld [vmem:[%s1 + $0x14] sm:$0xf]
  %v25 = vld [vmem:[%s1 + $0x18] sm:$0xf]
  %v26 = vld [vmem:[%s1 + $0x1c] sm:$0xf]
  %v27 = vld [vmem:[%s1 + $0x20] sm:$0xf]
  %v28 = vld [vmem:[%s2] sm:$0x1]
  %v30 = vperm.slane %v28, 0
  %v36 = vunpack.c.l.b16 %v15
  %v37 = vunpack.c.l.b16 %v16
  %v38 = vunpack.c.l.b16 %v17
  %v39 = vunpack.c.l.b16 %v18
  %v40 = vpack.c.b16 %v37, %v36
  %v41 = vpack.c.b16 %v39, %v38
  %v51 = vunpack.c.l.b16 %v19
  %v52 = vunpack.c.l.b16 %v20
  %v53 = vunpack.c.l.b16 %v21
  %v54 = vunpack.c.l.b16 %v22
  %v55 = vunpack.c.l.b16 %v23
  %v56 = vunpack.c.l.b16 %v24
  %v57 = vunpack.c.l.b16 %v25
  %v58 = vunpack.c.l.b16 %v26
  %v59 = vunpack.c.l.b16 %v27
  %v60 = vpack.c.b16 %v52, %v51
  %v61 = vpack.c.b16 %v54, %v53
  %v62 = vpack.c.b16 %v56, %v55
  %v63 = vpack.c.b16 %v58, %v57
  %v64 = vpack.c.b16 %v59, %v59
  %vm69 = vcmask 588800
  %v71 = vsel %vm69, %v40, 0
  %v74 = vsel %vm69, %v41, 0
  %vm76 = vcmask 1043456
  %v78 = vsel %vm76, %v64, 0
  %80 = vmatpush.bf16.msra.mxu0 0
  %81 = vmatpush.bf16.msra.mxu0 0
  %82 = vmatpush.bf16.msra.mxu0 0
  %83 = vmatpush.bf16.msra.mxu0 %v78
  %84 = vmatpush.bf16.msra.mxu0 %v63
  %85 = vmatpush.bf16.msra.mxu0 %v62
  %86 = vmatpush.bf16.msra.mxu0 %v61
  %87 = vmatpush.bf16.msra.mxu0 %v60
  %88 = vmatmul.bf16.gmra.mxu0 %v71
  %v89 = vpop.f32.mrf.mxu0
  %v90 = vadd.f32 %v30, %v89
  %v91 = vpop.f32.mrf.mxu0
  %v92 = vadd.f32 %v30, %v91
  %93 = vmatmul.bf16.gmra.mxu0 %v74
  %v94 = vpop.f32.mrf.mxu0
  %v95 = vadd.f32 %v30, %v94
  %v96 = vpop.f32.mrf.mxu0
  %v97 = vadd.f32 %v30, %v96
  %98 = vdwg.mxu0
  %v99 = vmax.f32 %v90, 0.0
  %v100 = vmax.f32 %v92, 0.0
  %v101 = vmax.f32 %v95, 0.0
  %v102 = vmax.f32 %v97, 0.0
  %v103 = vpack.c.bf16 %v99, %v99
  %v104 = vpack.c.bf16 %v100, %v100
  %v105 = vpack.c.bf16 %v101, %v101
  %v106 = vpack.c.bf16 %v102, %v102
  %107 = vst [vmem:[%s3] sm:$0xf] %v103
  %108 = vst [vmem:[%s3 + $0x4] sm:$0xf] %v104
  %109 = vst [vmem:[%s3 + $0x8] sm:$0xf] %v105
  %110 = vst [vmem:[%s3 + $0xc] sm:$0xf] %v106
  // Predicated region
  $region14: #{vae_forward.7} parent=0 // pred_check
    _
  $region15: #{vae_forward.7} parent=0 // pred_check_branch
    %112 = sbr.rel (0) target = $region17
  $region16: #{vae_forward.7} parent=0 // pred_region
    _
  $region17: #{vae_forward.7} parent=0 // pred_fallthru
    _
  // Predicated region
  $region18: #{vae_forward.7} parent=0 // pred_check
    _
  $region19: #{vae_forward.7} parent=0 // pred_check_branch
    %114 = sbr.rel (0) target = $region21
  $region20: #{vae_forward.7} parent=0 // pred_region
    _
  $region21: #{vae_forward.7} parent=0 // pred_fallthru
    _

// kernel: vae_forward.8
$region0: #{vae_forward.8}
  #allocation0 [shape = 'u32[]', space=smem, size = 0x4, offset = 0x4, fixed_abs, tag = 'smem constant byte address 0x4 - core index']
  #allocation1 [shape = 'u32[72,128]{1,0:T(1,128)}', space=vmem, size = 0x9000, scoped, tag = 'internal scratch']
  %s0 = inlined_call_operand.vmem [shape: bf16[2,256], index: 0, kind: input, shape index: {}]
  %s1 = inlined_call_operand.vmem [shape: bf16[256,64], index: 1, kind: input, shape index: {}]
  %s2 = inlined_call_operand.vmem [shape: f32[1,64], index: 2, kind: input, shape index: {}]
  %s3 = inlined_call_operand.vmem [shape: f32[2,32], index: 3, kind: input, shape index: {}]
  %s4 = inlined_call_operand.hbm [shape: f32[2,32], index: 4, kind: output, shape index: {0}]
  %s5 = inlined_call_operand.hbm [shape: f32[2,32], index: 5, kind: output, shape index: {1}]
  %s6 = inlined_call_operand.vmem [shape: f32[2,32], index: 6, kind: output, shape index: {2}]
  %7 = xla_tuple %s4, %s5, %s6
  %s8 = sld [smem:[#allocation0]]
  $region42: #{vae_forward.8} parent=0
    _
  %s10 = ssub.s32 1, %s8
  %s11 = scalar_select 0, %s10, %s8
  $region1: #{vae_forward.8} parent=0
    #allocation2 [shape = 'u8[1024]{0}', space=vmem, size = 0x400, scoped, tag = 'output window, operand 0, single buffered']
    #allocation3 [shape = 's32[1]{0}', space=sflag, size = 0x4, scoped, tag = 'scoped memory for vae_forward.8']
    #allocation4 [shape = 'u8[1024]{0}', space=vmem, size = 0x400, scoped, tag = 'output window, operand 1, single buffered']
    #allocation5 [shape = 's32[1]{0}', space=sflag, size = 0x4, scoped, tag = 'scoped memory for vae_forward.8']
    %12 = vsyncpa [#allocation3], 0
    %13 = vsyncpa [#allocation5], 0
    // Predicated region
    $region2: #{vae_forward.8} parent=1 // pred_check
      _
    $region3: #{vae_forward.8} parent=1 // pred_check_branch
      %15 = sbr.rel (0) target = $region5
    $region4: #{vae_forward.8} parent=1 // pred_region
      _
    $region5: #{vae_forward.8} parent=1 // pred_fallthru
      _
    // Predicated region
    $region6: #{vae_forward.8} parent=1 // pred_check
      _
    $region7: #{vae_forward.8} parent=1 // pred_check_branch
      %17 = sbr.rel (0) target = $region9
    $region8: #{vae_forward.8} parent=1 // pred_region
      _
    $region9: #{vae_forward.8} parent=1 // pred_fallthru
      _
    // Predicated region
    $region10: #{vae_forward.8} parent=1 // pred_check
      _
    $region11: #{vae_forward.8} parent=1 // pred_check_branch
      %19 = sbr.rel (0) target = $region13
    $region12: #{vae_forward.8} parent=1 // pred_region
      _
    $region13: #{vae_forward.8} parent=1 // pred_fallthru
      _
    // Predicated region
    $region14: #{vae_forward.8} parent=1 // pred_check
      _
    $region15: #{vae_forward.8} parent=1 // pred_check_branch
      %21 = sbr.rel (0) target = $region17
    $region16: #{vae_forward.8} parent=1 // pred_region
      _
    $region17: #{vae_forward.8} parent=1 // pred_fallthru
      _
    %v22 = vld [vmem:[%s0] sm:$0x3]
    %v23 = vld [vmem:[%s1] sm:$0xf]
    %v24 = vld [vmem:[%s1 + $0x4] sm:$0xf]
    %v25 = vld [vmem:[%s1 + $0x8] sm:$0xf]
    %v26 = vld [vmem:[%s1 + $0xc] sm:$0xf]
    %v27 = vld [vmem:[%s1 + $0x10] sm:$0xf]
    %v28 = vld [vmem:[%s1 + $0x14] sm:$0xf]
    %v29 = vld [vmem:[%s1 + $0x18] sm:$0xf]
    %v30 = vld [vmem:[%s1 + $0x1c] sm:$0xf]
    %v31 = vld [vmem:[%s1 + $0x20] sm:$0xf]
    %v32 = vld [vmem:[%s1 + $0x24] sm:$0xf]
    %v33 = vld [vmem:[%s1 + $0x28] sm:$0xf]
    %v34 = vld [vmem:[%s1 + $0x2c] sm:$0xf]
    %v35 = vld [vmem:[%s1 + $0x30] sm:$0xf]
    %v36 = vld [vmem:[%s1 + $0x34] sm:$0xf]
    %v37 = vld [vmem:[%s1 + $0x38] sm:$0xf]
    %v38 = vld [vmem:[%s1 + $0x3c] sm:$0xf]
    %v39 = vld [vmem:[%s1 + $0x40] sm:$0xf]
    %v40 = vld [vmem:[%s1 + $0x44] sm:$0xf]
    %v41 = vld [vmem:[%s1 + $0x48] sm:$0xf]
    %v42 = vld [vmem:[%s1 + $0x4c] sm:$0xf]
    %v43 = vld [vmem:[%s1 + $0x50] sm:$0xf]
    %v44 = vld [vmem:[%s1 + $0x54] sm:$0xf]
    %v45 = vld [vmem:[%s1 + $0x58] sm:$0xf]
    %v46 = vld [vmem:[%s1 + $0x5c] sm:$0xf]
    %v47 = vld [vmem:[%s1 + $0x60] sm:$0xf]
    %v48 = vld [vmem:[%s1 + $0x64] sm:$0xf]
    %v49 = vld [vmem:[%s1 + $0x68] sm:$0xf]
    %v50 = vld [vmem:[%s1 + $0x6c] sm:$0xf]
    %v51 = vld [vmem:[%s1 + $0x70] sm:$0xf]
    %v52 = vld [vmem:[%s1 + $0x74] sm:$0xf]
    %v53 = vld [vmem:[%s1 + $0x78] sm:$0xf]
    %v54 = vld [vmem:[%s1 + $0x7c] sm:$0xf]
    %v55 = vld [vmem:[%s2] sm:$0x1]
    %v57 = vperm.slane %v55, 0
    %60 = vst [vmem:[#allocation1] ss:$9 sm:$0xff] %v22
    %v61 = vld [vmem:[#allocation1] sm:$0xff]
    %v62 = vld [vmem:[#allocation1 + $0x9] sm:$0xff]
    %v97 = vunpack.c.l.b16 %v23
    %v98 = vunpack.c.l.b16 %v24
    %v99 = vunpack.c.l.b16 %v25
    %v100 = vunpack.c.l.b16 %v26
    %v101 = vunpack.c.l.b16 %v27
    %v102 = vunpack.c.l.b16 %v28
    %v103 = vunpack.c.l.b16 %v29
    %v104 = vunpack.c.l.b16 %v30
    %v105 = vunpack.c.l.b16 %v31
    %v106 = vunpack.c.l.b16 %v32
    %v107 = vunpack.c.l.b16 %v33
    %v108 = vunpack.c.l.b16 %v34
    %v109 = vunpack.c.l.b16 %v35
    %v110 = vunpack.c.l.b16 %v36
    %v111 = vunpack.c.l.b16 %v37
    %v112 = vunpack.c.l.b16 %v38
    %v113 = vunpack.c.l.b16 %v39
    %v114 = vunpack.c.l.b16 %v40
    %v115 = vunpack.c.l.b16 %v41
    %v116 = vunpack.c.l.b16 %v42
    %v117 = vunpack.c.l.b16 %v43
    %v118 = vunpack.c.l.b16 %v44
    %v119 = vunpack.c.l.b16 %v45
    %v120 = vunpack.c.l.b16 %v46
    %v121 = vunpack.c.l.b16 %v47
    %v122 = vunpack.c.l.b16 %v48
    %v123 = vunpack.c.l.b16 %v49
    %v124 = vunpack.c.l.b16 %v50
    %v125 = vunpack.c.l.b16 %v51
    %v126 = vunpack.c.l.b16 %v52
    %v127 = vunpack.c.l.b16 %v53
    %v128 = vunpack.c.l.b16 %v54
    %v129 = vpack.c.b16 %v98, %v97
    %v130 = vpack.c.b16 %v100, %v99
    %v131 = vpack.c.b16 %v102, %v101
    %v132 = vpack.c.b16 %v104, %v103
    %v133 = vpack.c.b16 %v106, %v105
    %v134 = vpack.c.b16 %v108, %v107
    %v135 = vpack.c.b16 %v110, %v109
    %v136 = vpack.c.b16 %v112, %v111
    %v137 = vpack.c.b16 %v114, %v113
    %v138 = vpack.c.b16 %v116, %v115
    %v139 = vpack.c.b16 %v118, %v117
    %v140 = vpack.c.b16 %v120, %v119
    %v141 = vpack.c.b16 %v122, %v121
    %v142 = vpack.c.b16 %v124, %v123
    %v143 = vpack.c.b16 %v126, %v125
    %v144 = vpack.c.b16 %v128, %v127
    %161 = vmatpush.bf16.msra.mxu0 %v136
    %162 = vmatpush.bf16.msra.mxu0 %v135
    %163 = vmatpush.bf16.msra.mxu0 %v134
    %164 = vmatpush.bf16.msra.mxu0 %v133
    %165 = vmatpush.bf16.msra.mxu0 %v132
    %166 = vmatpush.bf16.msra.mxu0 %v131
    %167 = vmatpush.bf16.msra.mxu0 %v130
    %168 = vmatpush.bf16.msra.mxu0 %v129
    %169 = vmatmul.bf16.gmra.mxu0 %v61
    %v170 = vpop.f32.mrf.mxu0
    %v171 = vadd.f32 %v57, %v170
    %v172 = vpop.f32.mrf.mxu0
    %173 = vdwg.mxu0
    %174 = vmatpush.bf16.msra.mxu0 %v144
    %175 = vmatpush.bf16.msra.mxu0 %v143
    %176 = vmatpush.bf16.msra.mxu0 %v142
    %177 = vmatpush.bf16.msra.mxu0 %v141
    %178 = vmatpush.bf16.msra.mxu0 %v140
    %179 = vmatpush.bf16.msra.mxu0 %v139
    %180 = vmatpush.bf16.msra.mxu0 %v138
    %181 = vmatpush.bf16.msra.mxu0 %v137
    %182 = vmatmul.bf16.gmra.mxu0 %v62
    %v183 = vpop.f32.mrf.mxu0
    %v184 = vadd.f32 %v171, %v183
    %v185 = vpop.f32.mrf.mxu0
    %186 = vdwg.mxu0
    %vm187 = vcmask 254976
    %188 = vst.msk [vmem:[#allocation2] sm:$0x3] %vm187, %v184
    %190 = vrot.lane.b32.xlu0 %v184, 96
    %v191 = vpop.permute.xlu0 %190
    %193 = vst.msk [vmem:[#allocation4] sm:$0x3] %vm187, %v191
    %v194 = vld [vmem:[%s3] sm:$0x3]
    %v195 = vmul.f32 %v184, 0.5
    %v196 = vmul.f32 %v195, 1.442695
    %v197 = vpow.pop %v196
    %199 = vrot.lane.b32.xlu0 %v197, 96
    %v200 = vpop.permute.xlu0 %199
    %v202 = vmul.f32 %v194, %v200
    %v203 = vadd.f32 %v184, %v202
    %204 = vst.msk [vmem:[%s6] sm:$0x3] %vm187, %v203
    // Predicated region
    $region18: #{vae_forward.8} parent=1 // pred_check
      _
    $region19: #{vae_forward.8} parent=1 // pred_check_branch
      %206 = sbr.rel (0) target = $region21
    $region20: #{vae_forward.8} parent=1 // pred_region
      %208 = vsyncadd [#allocation3], 0
      %s210 = sshll.u32 [#allocation2], 4
      %s211 = int_to_ptr.vmem [resolvable:$true] %s210
      %s212 = sshll.u32 %s4, 4
      %s213 = int_to_ptr.hbm [resolvable:$true] %s212
      %215 = dma.vmem_to_hbm [thread:$0]  %s211, 32, %s213, [#allocation3]
    $region21: #{vae_forward.8} parent=1 // pred_fallthru
      _
    // Predicated region
    $region22: #{vae_forward.8} parent=1 // pred_check
      _
    $region23: #{vae_forward.8} parent=1 // pred_check_branch
      %217 = sbr.rel (0) target = $region25
    $region24: #{vae_forward.8} parent=1 // pred_region
      %219 = vsyncadd [#allocation5], 0
      %s221 = sshll.u32 [#allocation4], 4
      %s222 = int_to_ptr.vmem [resolvable:$true] %s221
      %s223 = sshll.u32 %s5, 4
      %s224 = int_to_ptr.hbm [resolvable:$true] %s223
      %226 = dma.vmem_to_hbm [thread:$0]  %s222, 32, %s224, [#allocation5]
    $region25: #{vae_forward.8} parent=1 // pred_fallthru
      _
    // Predicated region
    $region26: #{vae_forward.8} parent=1 // pred_check
      _
    $region27: #{vae_forward.8} parent=1 // pred_check_branch
      %228 = sbr.rel (0) target = $region29
    $region28: #{vae_forward.8} parent=1 // pred_region
      _
    $region29: #{vae_forward.8} parent=1 // pred_fallthru
      _
    // Predicated region
    $region30: #{vae_forward.8} parent=1 // pred_check
      _
    $region31: #{vae_forward.8} parent=1 // pred_check_branch
      %230 = sbr.rel (0) target = $region33
    $region32: #{vae_forward.8} parent=1 // pred_region
      %232 = dma.done [#allocation3], 32
    $region33: #{vae_forward.8} parent=1 // pred_fallthru
      _
    // Predicated region
    $region34: #{vae_forward.8} parent=1 // pred_check
      _
    $region35: #{vae_forward.8} parent=1 // pred_check_branch
      %234 = sbr.rel (0) target = $region37
    $region36: #{vae_forward.8} parent=1 // pred_region
      %236 = dma.done [#allocation5], 32
    $region37: #{vae_forward.8} parent=1 // pred_fallthru
      _
    // Predicated region
    $region38: #{vae_forward.8} parent=1 // pred_check
      _
    $region39: #{vae_forward.8} parent=1 // pred_check_branch
      %238 = sbr.rel (0) target = $region41
    $region40: #{vae_forward.8} parent=1 // pred_region
      _
    $region41: #{vae_forward.8} parent=1 // pred_fallthru
      _
    %239 = vsyncpa [#allocation3], 1
    %240 = vsyncpa [#allocation5], 1

// kernel: vae_forward.9
$region0: #{vae_forward.9}
  #allocation0 [shape = 'u32[]', space=smem, size = 0x4, offset = 0x4, fixed_abs, tag = 'smem constant byte address 0x4 - core index']
  #allocation1 [shape = 'u32[72,128]{1,0:T(1,128)}', space=vmem, size = 0x9000, scoped, tag = 'internal scratch']
  %s0 = inlined_call_operand.vmem [shape: bf16[2,32], index: 0, kind: input, shape index: {}]
  %s1 = inlined_call_operand.vmem [shape: bf16[32,256], index: 1, kind: input, shape index: {}]
  %s2 = inlined_call_operand.vmem [shape: f32[1,256], index: 2, kind: input, shape index: {}]
  %s3 = inlined_call_operand.vmem [shape: bf16[2,256], index: 3, kind: output, shape index: {}]
  %s4 = sld [smem:[#allocation0]]
  $region22: #{vae_forward.9} parent=0
    _
  %s6 = ssub.s32 1, %s4
  %s7 = scalar_select 0, %s6, %s4
  // Predicated region
  $region2: #{vae_forward.9} parent=0 // pred_check
    _
  $region3: #{vae_forward.9} parent=0 // pred_check_branch
    %9 = sbr.rel (0) target = $region5
  $region4: #{vae_forward.9} parent=0 // pred_region
    _
  $region5: #{vae_forward.9} parent=0 // pred_fallthru
    _
  // Predicated region
  $region6: #{vae_forward.9} parent=0 // pred_check
    _
  $region7: #{vae_forward.9} parent=0 // pred_check_branch
    %11 = sbr.rel (0) target = $region9
  $region8: #{vae_forward.9} parent=0 // pred_region
    _
  $region9: #{vae_forward.9} parent=0 // pred_fallthru
    _
  // Predicated region
  $region10: #{vae_forward.9} parent=0 // pred_check
    _
  $region11: #{vae_forward.9} parent=0 // pred_check_branch
    %13 = sbr.rel (0) target = $region13
  $region12: #{vae_forward.9} parent=0 // pred_region
    _
  $region13: #{vae_forward.9} parent=0 // pred_fallthru
    _
  %v15 = vld [vmem:[%s0] sm:$0x1]
  %v16 = vld [vmem:[%s1] sm:$0xff]
  %v17 = vld [vmem:[%s1 + $0x8] sm:$0xff]
  %v18 = vld [vmem:[%s1 + $0x10] sm:$0xff]
  %v19 = vld [vmem:[%s1 + $0x18] sm:$0xff]
  %v20 = vld [vmem:[%s2] sm:$0x3]
  %v22 = vperm.slane %v20, 0
  %v23 = vperm.slane %v20, 1
  %v30 = vunpack.c.l.b16 %v16
  %v31 = vunpack.c.h.b16 %v16
  %v32 = vunpack.c.l.b16 %v17
  %v33 = vunpack.c.h.b16 %v17
  %v34 = vunpack.c.l.b16 %v18
  %v35 = vunpack.c.h.b16 %v18
  %v36 = vunpack.c.l.b16 %v19
  %v37 = vunpack.c.h.b16 %v19
  %v38 = vpack.c.b16 %v32, %v30
  %v39 = vpack.c.b16 %v33, %v31
  %v40 = vpack.c.b16 %v36, %v34
  %v41 = vpack.c.b16 %v37, %v35
  %vm46 = vcmask 261120
  %v48 = vsel %vm46, %v15, 0
  %50 = vmatpush.bf16.msra.mxu0 0
  %51 = vmatpush.bf16.msra.mxu0 0
  %52 = vmatpush.bf16.msra.mxu0 0
  %53 = vmatpush.bf16.msra.mxu0 0
  %54 = vmatpush.bf16.msra.mxu0 0
  %55 = vmatpush.bf16.msra.mxu0 0
  %56 = vmatpush.bf16.msra.mxu0 %v40
  %57 = vmatpush.bf16.msra.mxu0 %v38
  %58 = vmatmul.bf16.gmra.mxu0 %v48
  %v59 = vpop.f32.mrf.mxu0
  %v60 = vadd.f32 %v22, %v59
  %v61 = vpop.f32.mrf.mxu0
  %62 = vdwg.mxu0
  %63 = vmatpush.bf16.msra.mxu0 0
  %64 = vmatpush.bf16.msra.mxu0 0
  %65 = vmatpush.bf16.msra.mxu0 0
  %66 = vmatpush.bf16.msra.mxu0 0
  %67 = vmatpush.bf16.msra.mxu0 0
  %68 = vmatpush.bf16.msra.mxu0 0
  %69 = vmatpush.bf16.msra.mxu0 %v41
  %70 = vmatpush.bf16.msra.mxu0 %v39
  %71 = vmatmul.bf16.gmra.mxu0 %v48
  %v72 = vpop.f32.mrf.mxu0
  %v73 = vadd.f32 %v23, %v72
  %v74 = vpop.f32.mrf.mxu0
  %75 = vdwg.mxu0
  %v76 = vmax.f32 %v60, 0.0
  %v77 = vmax.f32 %v73, 0.0
  %v78 = vpack.c.bf16 %v77, %v76
  %v80 = vrot.slane %v78, 3
  %vm81 = vcmask 1040384
  %v84 = vsel %vm81, %v78, %v80
  %86 = vst [vmem:[%s3] sm:$0x3] %v84
  // Predicated region
  $region14: #{vae_forward.9} parent=0 // pred_check
    _
  $region15: #{vae_forward.9} parent=0 // pred_check_branch
    %88 = sbr.rel (0) target = $region17
  $region16: #{vae_forward.9} parent=0 // pred_region
    _
  $region17: #{vae_forward.9} parent=0 // pred_fallthru
    _
  // Predicated region
  $region18: #{vae_forward.9} parent=0 // pred_check
    _
  $region19: #{vae_forward.9} parent=0 // pred_check_branch
    %90 = sbr.rel (0) target = $region21
  $region20: #{vae_forward.9} parent=0 // pred_region
    _
  $region21: #{vae_forward.9} parent=0 // pred_fallthru
    _

// kernel: vae_forward.10
$region0: #{vae_forward.10}
  #allocation0 [shape = 'u32[]', space=smem, size = 0x4, offset = 0x4, fixed_abs, tag = 'smem constant byte address 0x4 - core index']
  #allocation1 [shape = 'u32[72,128]{1,0:T(1,128)}', space=vmem, size = 0x9000, scoped, tag = 'internal scratch']
  %s0 = inlined_call_operand.vmem [shape: bf16[128,144], index: 0, kind: input, shape index: {}]
  %s1 = inlined_call_operand.vmem [shape: bf16[144,128], index: 1, kind: input, shape index: {}]
  %s2 = inlined_call_operand.vmem [shape: f32[1,128], index: 2, kind: input, shape index: {}]
  %s3 = inlined_call_operand.vmem [shape: bf16[128,128], index: 3, kind: output, shape index: {}]
  %s4 = sld [smem:[#allocation0]]
  $region22: #{vae_forward.10} parent=0
    _
  %s6 = ssub.s32 1, %s4
  %s7 = scalar_select 0, %s6, %s4
  // Predicated region
  $region2: #{vae_forward.10} parent=0 // pred_check
    _
  $region3: #{vae_forward.10} parent=0 // pred_check_branch
    %9 = sbr.rel (0) target = $region5
  $region4: #{vae_forward.10} parent=0 // pred_region
    _
  $region5: #{vae_forward.10} parent=0 // pred_fallthru
    _
  // Predicated region
  $region6: #{vae_forward.10} parent=0 // pred_check
    _
  $region7: #{vae_forward.10} parent=0 // pred_check_branch
    %11 = sbr.rel (0) target = $region9
  $region8: #{vae_forward.10} parent=0 // pred_region
    _
  $region9: #{vae_forward.10} parent=0 // pred_fallthru
    _
  // Predicated region
  $region10: #{vae_forward.10} parent=0 // pred_check
    _
  $region11: #{vae_forward.10} parent=0 // pred_check_branch
    %13 = sbr.rel (0) target = $region13
  $region12: #{vae_forward.10} parent=0 // pred_region
    _
  $region13: #{vae_forward.10} parent=0 // pred_fallthru
    _
  %v15 = vld [vmem:[%s0] sm:$0xff]
  %v16 = vld [vmem:[%s0 + $0x8] sm:$0xff]
  %v17 = vld [vmem:[%s0 + $0x10] sm:$0xff]
  %v18 = vld [vmem:[%s0 + $0x18] sm:$0xff]
  %v19 = vld [vmem:[%s0 + $0x20] sm:$0xff]
  %v20 = vld [vmem:[%s0 + $0x28] sm:$0xff]
  %v21 = vld [vmem:[%s0 + $0x30] sm:$0xff]
  %v22 = vld [vmem:[%s0 + $0x38] sm:$0xff]
  %v23 = vld [vmem:[%s0 + $0x40] sm:$0xff]
  %v24 = vld [vmem:[%s0 + $0x48] sm:$0xff]
  %v25 = vld [vmem:[%s0 + $0x50] sm:$0xff]
  %v26 = vld [vmem:[%s0 + $0x58] sm:$0xff]
  %v27 = vld [vmem:[%s0 + $0x60] sm:$0xff]
  %v28 = vld [vmem:[%s0 + $0x68] sm:$0xff]
  %v29 = vld [vmem:[%s0 + $0x70] sm:$0xff]
  %v30 = vld [vmem:[%s0 + $0x78] sm:$0xff]
  %v31 = vld [vmem:[%s1] sm:$0xf]
  %v32 = vld [vmem:[%s1 + $0x4] sm:$0xf]
  %v33 = vld [vmem:[%s1 + $0x8] sm:$0xf]
  %v34 = vld [vmem:[%s1 + $0xc] sm:$0xf]
  %v35 = vld [vmem:[%s1 + $0x10] sm:$0xf]
  %v36 = vld [vmem:[%s1 + $0x14] sm:$0xf]
  %v37 = vld [vmem:[%s1 + $0x18] sm:$0xf]
  %v38 = vld [vmem:[%s1 + $0x1c] sm:$0xf]
  %v39 = vld [vmem:[%s1 + $0x20] sm:$0xf]
  %v40 = vld [vmem:[%s1 + $0x24] sm:$0xf]
  %v41 = vld [vmem:[%s1 + $0x28] sm:$0xf]
  %v42 = vld [vmem:[%s1 + $0x2c] sm:$0xf]
  %v43 = vld [vmem:[%s1 + $0x30] sm:$0xf]
  %v44 = vld [vmem:[%s1 + $0x34] sm:$0xf]
  %v45 = vld [vmem:[%s1 + $0x38] sm:$0xf]
  %v46 = vld [vmem:[%s1 + $0x3c] sm:$0xf]
  %v47 = vld [vmem:[%s1 + $0x40] sm:$0xf]
  %v48 = vld [vmem:[%s1 + $0x44] sm:$0xf]
  %v49 = vld [vmem:[%s2] sm:$0x1]
  %v51 = vperm.slane %v49, 0
  %v69 = vunpack.c.l.b16 %v15
  %v70 = vunpack.c.h.b16 %v15
  %v71 = vunpack.c.l.b16 %v16
  %v72 = vunpack.c.h.b16 %v16
  %v73 = vunpack.c.l.b16 %v17
  %v74 = vunpack.c.h.b16 %v17
  %v75 = vunpack.c.l.b16 %v18
  %v76 = vunpack.c.h.b16 %v18
  %v77 = vunpack.c.l.b16 %v19
  %v78 = vunpack.c.h.b16 %v19
  %v79 = vunpack.c.l.b16 %v20
  %v80 = vunpack.c.h.b16 %v20
  %v81 = vunpack.c.l.b16 %v21
  %v82 = vunpack.c.h.b16 %v21
  %v83 = vunpack.c.l.b16 %v22
  %v84 = vunpack.c.h.b16 %v22
  %v85 = vunpack.c.l.b16 %v23
  %v86 = vunpack.c.h.b16 %v23
  %v87 = vunpack.c.l.b16 %v24
  %v88 = vunpack.c.h.b16 %v24
  %v89 = vunpack.c.l.b16 %v25
  %v90 = vunpack.c.h.b16 %v25
  %v91 = vunpack.c.l.b16 %v26
  %v92 = vunpack.c.h.b16 %v26
  %v93 = vunpack.c.l.b16 %v27
  %v94 = vunpack.c.h.b16 %v27
  %v95 = vunpack.c.l.b16 %v28
  %v96 = vunpack.c.h.b16 %v28
  %v97 = vunpack.c.l.b16 %v29
  %v98 = vunpack.c.h.b16 %v29
  %v99 = vunpack.c.l.b16 %v30
  %v100 = vunpack.c.h.b16 %v30
  %v101 = vpack.c.b16 %v71, %v69
  %v102 = vpack.c.b16 %v72, %v70
  %v103 = vpack.c.b16 %v75, %v73
  %v104 = vpack.c.b16 %v76, %v74
  %v105 = vpack.c.b16 %v79, %v77
  %v106 = vpack.c.b16 %v80, %v78
  %v107 = vpack.c.b16 %v83, %v81
  %v108 = vpack.c.b16 %v84, %v82
  %v109 = vpack.c.b16 %v87, %v85
  %v110 = vpack.c.b16 %v88, %v86
  %v111 = vpack.c.b16 %v91, %v89
  %v112 = vpack.c.b16 %v92, %v90
  %v113 = vpack.c.b16 %v95, %v93
  %v114 = vpack.c.b16 %v96, %v94
  %v115 = vpack.c.b16 %v99, %v97
  %v116 = vpack.c.b16 %v100, %v98
  %v143 = vunpack.c.l.b16 %v31
  %v144 = vunpack.c.l.b16 %v32
  %v145 = vunpack.c.l.b16 %v33
  %v146 = vunpack.c.l.b16 %v34
  %v147 = vunpack.c.l.b16 %v35
  %v148 = vunpack.c.l.b16 %v36
  %v149 = vunpack.c.l.b16 %v37
  %v150 = vunpack.c.l.b16 %v38
  %v151 = vunpack.c.l.b16 %v39
  %v152 = vunpack.c.l.b16 %v40
  %v153 = vunpack.c.l.b16 %v41
  %v154 = vunpack.c.l.b16 %v42
  %v155 = vunpack.c.l.b16 %v43
  %v156 = vunpack.c.l.b16 %v44
  %v157 = vunpack.c.l.b16 %v45
  %v158 = vunpack.c.l.b16 %v46
  %v159 = vunpack.c.l.b16 %v47
  %v160 = vunpack.c.l.b16 %v48
  %v161 = vpack.c.b16 %v144, %v143
  %v162 = vpack.c.b16 %v146, %v145
  %v163 = vpack.c.b16 %v148, %v147
  %v164 = vpack.c.b16 %v150, %v149
  %v165 = vpack.c.b16 %v152, %v151
  %v166 = vpack.c.b16 %v154, %v153
  %v167 = vpack.c.b16 %v156, %v155
  %v168 = vpack.c.b16 %v158, %v157
  %v169 = vpack.c.b16 %v160, %v159
  %vm179 = vcmask 130048
  %v181 = vsel %vm179, %v102, 0
  %v184 = vsel %vm179, %v104, 0
  %v187 = vsel %vm179, %v106, 0
  %v190 = vsel %vm179, %v108, 0
  %v193 = vsel %vm179, %v110, 0
  %v196 = vsel %vm179, %v112, 0
  %v199 = vsel %vm179, %v114, 0
  %v202 = vsel %vm179, %v116, 0
  %204 = vmatpush.bf16.msra.mxu0 %v168
  %205 = vmatpush.bf16.msra.mxu0 %v167
  %206 = vmatpush.bf16.msra.mxu0 %v166
  %207 = vmatpush.bf16.msra.mxu0 %v165
  %208 = vmatpush.bf16.msra.mxu0 %v164
  %209 = vmatpush.bf16.msra.mxu0 %v163
  %210 = vmatpush.bf16.msra.mxu0 %v162
  %211 = vmatpush.bf16.msra.mxu0 %v161
  %212 = vmatmul.bf16.gmra.mxu0 %v101
  %v213 = vpop.f32.mrf.mxu0
  %v214 = vadd.f32 %v51, %v213
  %v215 = vpop.f32.mrf.mxu0
  %v216 = vadd.f32 %v51, %v215
  %217 = vmatmul.bf16.gmra.mxu0 %v103
  %v218 = vpop.f32.mrf.mxu0
  %v219 = vadd.f32 %v51, %v218
  %v220 = vpop.f32.mrf.mxu0
  %v221 = vadd.f32 %v51, %v220
  %222 = vmatmul.bf16.gmra.mxu0 %v105
  %v223 = vpop.f32.mrf.mxu0
  %v224 = vadd.f32 %v51, %v223
  %v225 = vpop.f32.mrf.mxu0
  %v226 = vadd.f32 %v51, %v225
  %227 = vmatmul.bf16.gmra.mxu0 %v107
  %v228 = vpop.f32.mrf.mxu0
  %v229 = vadd.f32 %v51, %v228
  %v230 = vpop.f32.mrf.mxu0
  %v231 = vadd.f32 %v51, %v230
  %232 = vmatmul.bf16.gmra.mxu0 %v109
  %v233 = vpop.f32.mrf.mxu0
  %v234 = vadd.f32 %v51, %v233
  %v235 = vpop.f32.mrf.mxu0
  %v236 = vadd.f32 %v51, %v235
  %237 = vmatmul.bf16.gmra.mxu0 %v111
  %v238 = vpop.f32.mrf.mxu0
  %v239 = vadd.f32 %v51, %v238
  %v240 = vpop.f32.mrf.mxu0
  %v241 = vadd.f32 %v51, %v240
  %242 = vmatmul.bf16.gmra.mxu0 %v113
  %v243 = vpop.f32.mrf.mxu0
  %v244 = vadd.f32 %v51, %v243
  %v245 = vpop.f32.mrf.mxu0
  %v246 = vadd.f32 %v51, %v245
  %247 = vmatmul.bf16.gmra.mxu0 %v115
  %v248 = vpop.f32.mrf.mxu0
  %v249 = vadd.f32 %v51, %v248
  %v250 = vpop.f32.mrf.mxu0
  %v251 = vadd.f32 %v51, %v250
  %252 = vdwg.mxu0
  %253 = vmatpush.bf16.msra.mxu0 0
  %254 = vmatpush.bf16.msra.mxu0 0
  %255 = vmatpush.bf16.msra.mxu0 0
  %256 = vmatpush.bf16.msra.mxu0 0
  %257 = vmatpush.bf16.msra.mxu0 0
  %258 = vmatpush.bf16.msra.mxu0 0
  %259 = vmatpush.bf16.msra.mxu0 0
  %260 = vmatpush.bf16.msra.mxu0 %v169
  %261 = vmatmul.bf16.gmra.mxu0 %v181
  %v262 = vpop.f32.mrf.mxu0
  %v263 = vadd.f32 %v214, %v262
  %v264 = vpop.f32.mrf.mxu0
  %v265 = vadd.f32 %v216, %v264
  %266 = vmatmul.bf16.gmra.mxu0 %v184
  %v267 = vpop.f32.mrf.mxu0
  %v268 = vadd.f32 %v219, %v267
  %v269 = vpop.f32.mrf.mxu0
  %v270 = vadd.f32 %v221, %v269
  %271 = vmatmul.bf16.gmra.mxu0 %v187
  %v272 = vpop.f32.mrf.mxu0
  %v273 = vadd.f32 %v224, %v272
  %v274 = vpop.f32.mrf.mxu0
  %v275 = vadd.f32 %v226, %v274
  %276 = vmatmul.bf16.gmra.mxu0 %v190
  %v277 = vpop.f32.mrf.mxu0
  %v278 = vadd.f32 %v229, %v277
  %v279 = vpop.f32.mrf.mxu0
  %v280 = vadd.f32 %v231, %v279
  %281 = vmatmul.bf16.gmra.mxu0 %v193
  %v282 = vpop.f32.mrf.mxu0
  %v283 = vadd.f32 %v234, %v282
  %v284 = vpop.f32.mrf.mxu0
  %v285 = vadd.f32 %v236, %v284
  %286 = vmatmul.bf16.gmra.mxu0 %v196
  %v287 = vpop.f32.mrf.mxu0
  %v288 = vadd.f32 %v239, %v287
  %v289 = vpop.f32.mrf.mxu0
  %v290 = vadd.f32 %v241, %v289
  %291 = vmatmul.bf16.gmra.mxu0 %v199
  %v292 = vpop.f32.mrf.mxu0
  %v293 = vadd.f32 %v244, %v292
  %v294 = vpop.f32.mrf.mxu0
  %v295 = vadd.f32 %v246, %v294
  %296 = vmatmul.bf16.gmra.mxu0 %v202
  %v297 = vpop.f32.mrf.mxu0
  %v298 = vadd.f32 %v249, %v297
  %v299 = vpop.f32.mrf.mxu0
  %v300 = vadd.f32 %v251, %v299
  %301 = vdwg.mxu0
  %v302 = vmax.f32 %v263, 0.0
  %v303 = vmax.f32 %v265, 0.0
  %v304 = vmax.f32 %v268, 0.0
  %v305 = vmax.f32 %v270, 0.0
  %v306 = vmax.f32 %v273, 0.0
  %v307 = vmax.f32 %v275, 0.0
  %v308 = vmax.f32 %v278, 0.0
  %v309 = vmax.f32 %v280, 0.0
  %v310 = vmax.f32 %v283, 0.0
  %v311 = vmax.f32 %v285, 0.0
  %v312 = vmax.f32 %v288, 0.0
  %v313 = vmax.f32 %v290, 0.0
  %v314 = vmax.f32 %v293, 0.0
  %v315 = vmax.f32 %v295, 0.0
  %v316 = vmax.f32 %v298, 0.0
  %v317 = vmax.f32 %v300, 0.0
  %v318 = vpack.c.bf16 %v302, %v302
  %v319 = vpack.c.bf16 %v303, %v303
  %v320 = vpack.c.bf16 %v304, %v304
  %v321 = vpack.c.bf16 %v305, %v305
  %v322 = vpack.c.bf16 %v306, %v306
  %v323 = vpack.c.bf16 %v307, %v307
  %v324 = vpack.c.bf16 %v308, %v308
  %v325 = vpack.c.bf16 %v309, %v309
  %v326 = vpack.c.bf16 %v310, %v310
  %v327 = vpack.c.bf16 %v311, %v311
  %v328 = vpack.c.bf16 %v312, %v312
  %v329 = vpack.c.bf16 %v313, %v313
  %v330 = vpack.c.bf16 %v314, %v314
  %v331 = vpack.c.bf16 %v315, %v315
  %v332 = vpack.c.bf16 %v316, %v316
  %v333 = vpack.c.bf16 %v317, %v317
  %334 = vst [vmem:[%s3] sm:$0xf] %v318
  %335 = vst [vmem:[%s3 + $0x4] sm:$0xf] %v319
  %336 = vst [vmem:[%s3 + $0x8] sm:$0xf] %v320
  %337 = vst [vmem:[%s3 + $0xc] sm:$0xf] %v321
  %338 = vst [vmem:[%s3 + $0x10] sm:$0xf] %v322
  %339 = vst [vmem:[%s3 + $0x14] sm:$0xf] %v323
  %340 = vst [vmem:[%s3 + $0x18] sm:$0xf] %v324
  %341 = vst [vmem:[%s3 + $0x1c] sm:$0xf] %v325
  %342 = vst [vmem:[%s3 + $0x20] sm:$0xf] %v326
  %343 = vst [vmem:[%s3 + $0x24] sm:$0xf] %v327
  %344 = vst [vmem:[%s3 + $0x28] sm:$0xf] %v328
  %345 = vst [vmem:[%s3 + $0x2c] sm:$0xf] %v329
  %346 = vst [vmem:[%s3 + $0x30] sm:$0xf] %v330
  %347 = vst [vmem:[%s3 + $0x34] sm:$0xf] %v331
  %348 = vst [vmem:[%s3 + $0x38] sm:$0xf] %v332
  %349 = vst [vmem:[%s3 + $0x3c] sm:$0xf] %v333
  // Predicated region
  $region14: #{vae_forward.10} parent=0 // pred_check
    _
  $region15: #{vae_forward.10} parent=0 // pred_check_branch
    %351 = sbr.rel (0) target = $region17
  $region16: #{vae_forward.10} parent=0 // pred_region
    _
  $region17: #{vae_forward.10} parent=0 // pred_fallthru
    _
  // Predicated region
  $region18: #{vae_forward.10} parent=0 // pred_check
    _
  $region19: #{vae_forward.10} parent=0 // pred_check_branch
    %353 = sbr.rel (0) target = $region21
  $region20: #{vae_forward.10} parent=0 // pred_region
    _
  $region21: #{vae_forward.10} parent=0 // pred_fallthru
    _

// kernel: vae_forward.11
$region0: #{vae_forward.11}
  #allocation0 [shape = 'u32[]', space=smem, size = 0x4, offset = 0x4, fixed_abs, tag = 'smem constant byte address 0x4 - core index']
  #allocation1 [shape = 'u32[72,128]{1,0:T(1,128)}', space=vmem, size = 0x9000, scoped, tag = 'internal scratch']
  %s0 = inlined_call_operand.vmem [shape: bf16[512,72], index: 0, kind: input, shape index: {}]
  %s1 = inlined_call_operand.vmem [shape: bf16[72,128], index: 1, kind: input, shape index: {}]
  %s2 = inlined_call_operand.vmem [shape: f32[1,128], index: 2, kind: input, shape index: {}]
  %s3 = inlined_call_operand.vmem [shape: f32[512,128], index: 3, kind: output, shape index: {}]
  %s4 = sld [smem:[#allocation0]]
  $region45: #{vae_forward.11} parent=0
    _
  %s6 = ssub.s32 1, %s4
  %s7 = scalar_select 0, %s6, %s4
  loop: start=0, step=1, limit=4
  $region2: #{vae_forward.11} parent=0 // loop_pre_header
    _
  $region3: #{vae_forward.11} parent=0 // loop_header
    %s9 = sphi 0, %s13
    %p10 = scmp.ge.s32.totalorder %s9, 4
    %s19 = sphi 0, %s21
    %s22 = sphi 0, %s19
    %s23 = sphi 0, %s22
    %s39 = sphi 0, %s23
    %s43 = sphi 0, %s43
    %s45 = sphi 0, %s43
    %s46 = sphi 0, %s45
    %s60 = sphi 0, %s46
    %s64 = sphi 0, %s64
    %s66 = sphi 0, %s64
    %s67 = sphi 0, %s66
    %s81 = sphi 0, %s67
    %s87 = sphi 0, %s89
    %s90 = sphi 0, %s87
    %s91 = sphi 0, %s90
    %s107 = sphi 0, %s91
  $region4: #{vae_forward.11} parent=0 // loop_header_branch
    %12 = sbr.rel (%p10) target = $region8
  $region5: #{vae_forward.11} parent=0 // loop_body
    %s14 = ssub.s32 %s9, 1
    %s15 = ssub.s32 %s9, 2
    %s16 = sadd.s32 %s9, 1
    %s17 = ssub.s32 %s9, %s16
    %p18 = scmp.eq.s32.totalorder %s17, 0
    %s20 = sadd.s32 %s19, 1
    %s21 = scalar_select %p18, %s19, %s20
    %p24 = pneg %p18
    %p25 = scmp.eq.s32.totalorder %s9, 1
    %p26 = por %p24, %p25
    %p27 = scmp.ne.s32.totalorder %s19, %s22
    %p28 = scmp.eq.s32.totalorder %s9, 0
    %p29 = por %p27, %p28
    %p30 = scmp.ne.s32.totalorder %s19, %s22
    %p31 = scmp.eq.s32.totalorder %s14, 1
    %p32 = por %p30, %p31
    %p33 = scmp.ne.s32.totalorder %s22, %s23
    %p34 = scmp.eq.s32.totalorder %s14, 0
    %p35 = por %p33, %p34
    %p36 = scmp.ne.s32.totalorder %s22, %s23
    %p37 = scmp.eq.s32.totalorder %s15, 1
    %p38 = por %p36, %p37
    %p40 = scmp.ne.s32.totalorder %s23, %s39
    %p41 = scmp.eq.s32.totalorder %s15, 0
    %p42 = por %p40, %p41
    %s44 = sadd.s32 %s43, 1
    %p47 = scmp.eq.s32.totalorder %s9, 1
    %p48 = scmp.ne.s32.totalorder %s43, %s45
    %p49 = scmp.eq.s32.totalorder %s9, 0
    %p50 = por %p48, %p49
    %p51 = scmp.ne.s32.totalorder %s43, %s45
    %p52 = scmp.eq.s32.totalorder %s14, 1
    %p53 = por %p51, %p52
    %p54 = scmp.ne.s32.totalorder %s45, %s46
    %p55 = scmp.eq.s32.totalorder %s14, 0
    %p56 = por %p54, %p55
    %p57 = scmp.ne.s32.totalorder %s45, %s46
    %p58 = scmp.eq.s32.totalorder %s15, 1
    %p59 = por %p57, %p58
    %p61 = scmp.ne.s32.totalorder %s46, %s60
    %p62 = scmp.eq.s32.totalorder %s15, 0
    %p63 = por %p61, %p62
    %s65 = sadd.s32 %s64, 1
    %p68 = scmp.eq.s32.totalorder %s9, 1
    %p69 = scmp.ne.s32.totalorder %s64, %s66
    %p70 = scmp.eq.s32.totalorder %s9, 0
    %p71 = por %p69, %p70
    %p72 = scmp.ne.s32.totalorder %s64, %s66
    %p73 = scmp.eq.s32.totalorder %s14, 1
    %p74 = por %p72, %p73
    %p75 = scmp.ne.s32.totalorder %s66, %s67
    %p76 = scmp.eq.s32.totalorder %s14, 0
    %p77 = por %p75, %p76
    %p78 = scmp.ne.s32.totalorder %s66, %s67
    %p79 = scmp.eq.s32.totalorder %s15, 1
    %p80 = por %p78, %p79
    %p82 = scmp.ne.s32.totalorder %s67, %s81
    %p83 = scmp.eq.s32.totalorder %s15, 0
    %p84 = por %p82, %p83
    %s85 = ssub.s32 %s9, %s16
    %p86 = scmp.eq.s32.totalorder %s85, 0
    %s88 = sadd.s32 %s87, 1
    %s89 = scalar_select %p86, %s87, %s88
    %p92 = pneg %p86
    %p93 = scmp.eq.s32.totalorder %s9, 1
    %p94 = por %p92, %p93
    %p95 = scmp.ne.s32.totalorder %s87, %s90
    %p96 = scmp.eq.s32.totalorder %s9, 0
    %p97 = por %p95, %p96
    %p98 = scmp.ne.s32.totalorder %s87, %s90
    %p99 = scmp.eq.s32.totalorder %s14, 1
    %p100 = por %p98, %p99
    %p101 = scmp.ne.s32.totalorder %s90, %s91
    %p102 = scmp.eq.s32.totalorder %s14, 0
    %p103 = por %p101, %p102
    %p104 = scmp.ne.s32.totalorder %s90, %s91
    %p105 = scmp.eq.s32.totalorder %s15, 1
    %p106 = por %p104, %p105
    %p108 = scmp.ne.s32.totalorder %s91, %s107
    %p109 = scmp.eq.s32.totalorder %s15, 0
    %p110 = por %p108, %p109
    %p111 = scmp.le.s32.totalorder 1, %s9
    %p112 = scmp.lt.s32.totalorder %s9, 3
    %p113 = pnand %p111, %p112
    %p114 = pneg %p113
    // Predicated region
    $region9: #{vae_forward.11} parent=5 // pred_check
      _
    $region10: #{vae_forward.11} parent=5 // pred_check_branch
      %116 = sbr.rel (%p113) target = $region12
    $region11: #{vae_forward.11} parent=5 // pred_region
      %s117 = ssub.s32 %s9, 1
      // Predicated region
      $region13: #{vae_forward.11} parent=11 // pred_check
        %p118 = pneg %p56
      $region14: #{vae_forward.11} parent=11 // pred_check_branch
        %120 = sbr.rel (%p118) target = $region16
      $region15: #{vae_forward.11} parent=11 // pred_region
        _
      $region16: #{vae_forward.11} parent=11 // pred_fallthru
        _
      // Predicated region
      $region17: #{vae_forward.11} parent=11 // pred_check
        %p121 = pneg %p77
      $region18: #{vae_forward.11} parent=11 // pred_check_branch
        %123 = sbr.rel (%p121) target = $region20
      $region19: #{vae_forward.11} parent=11 // pred_region
        _
      $region20: #{vae_forward.11} parent=11 // pred_fallthru
        _
    $region12: #{vae_forward.11} parent=5 // pred_fallthru
      _
    %p124 = scmp.lt.s32.totalorder %s9, 2
    // Predicated region
    $region21: #{vae_forward.11} parent=5 // pred_check
      %p125 = pneg %p124
    $region22: #{vae_forward.11} parent=5 // pred_check_branch
      %127 = sbr.rel (%p125) target = $region24
    $region23: #{vae_forward.11} parent=5 // pred_region
      // Predicated region
      $region25: #{vae_forward.11} parent=23 // pred_check
        %p128 = pneg %p29
      $region26: #{vae_forward.11} parent=23 // pred_check_branch
        %130 = sbr.rel (%p128) target = $region28
      $region27: #{vae_forward.11} parent=23 // pred_region
        %s131 = smul.u32 32, %s9
        %p132 = scmp.lt.s32.totalorder %s131, 63
        %s133 = scalar_select %p132, %s131, 63
        %s134 = smul.addr %s133, 4
        %s135 = scalar_lea.vmem %s0, %s134
        %s136 = smul.u32 32, %s9
      $region28: #{vae_forward.11} parent=23 // pred_fallthru
        _
    $region24: #{vae_forward.11} parent=5 // pred_fallthru
      _
    %p137 = scmp.le.s32.totalorder 1, %s9
    %p138 = scmp.lt.s32.totalorder %s9, 3
    %p139 = pnand %p137, %p138
    %p140 = pneg %p139
    // Predicated region
    $region29: #{vae_forward.11} parent=5 // pred_check
      _
    $region30: #{vae_forward.11} parent=5 // pred_check_branch
      %142 = sbr.rel (%p139) target = $region32
    $region31: #{vae_forward.11} parent=5 // pred_region
      %s143 = ssub.s32 %s9, 1
      %s144 = smul.u32 32, %s14
      %p145 = scmp.lt.s32.totalorder %s144, 63
      %s146 = scalar_select %p145, %s144, 63
      %s147 = smul.addr %s146, 4
      %s148 = scalar_lea.vmem %s0, %s147
      %p149 = pneg %p35
      %p150 = pneg %p32
      %p151 = pneg %p56
      %p152 = pneg %p53
      %p153 = pneg %p77
      %p154 = pneg %p74
      %p155 = pneg %p103
      %p156 = pneg %p100
      %s157 = smul.u32 32, %s14
      %p158 = scmp.lt.s32.totalorder %s157, 63
      %s159 = scalar_select %p158, %s157, 63
      %s160 = smul.addr %s159, 8
      %s161 = scalar_lea.vmem %s3, %s160
      %s162 = smul.u32 32, %s14
      %p163 = scmp.lt.s32.totalorder %s162, 63
      %s164 = scalar_select %p163, %s162, 63
      %s165 = smul.addr %s164, 4
      %s166 = scalar_lea.vmem %s0, %s165
      %s167 = smul.u32 32, %s14
      %s168 = smul.u32 32, %s14
      %p169 = scmp.lt.s32.totalorder %s168, 63
      %s170 = scalar_select %p169, %s168, 63
      %s171 = smul.addr %s170, 8
      %s172 = scalar_lea.vmem %s3, %s171
      %s173 = smul.u32 32, %s14
      %v175 = vld [vmem:[%s166] sm:$0xf]
      %v176 = vld [vmem:[%s166 + $0x4] sm:$0xf]
      %v177 = vld [vmem:[%s166 + $0x8] sm:$0xf]
      %v178 = vld [vmem:[%s166 + $0xc] sm:$0xf]
      %v179 = vld [vmem:[%s166 + $0x10] sm:$0xf]
      %v180 = vld [vmem:[%s166 + $0x14] sm:$0xf]
      %v181 = vld [vmem:[%s166 + $0x18] sm:$0xf]
      %v182 = vld [vmem:[%s166 + $0x1c] sm:$0xf]
      %v183 = vld [vmem:[%s166 + $0x20] sm:$0xf]
      %v184 = vld [vmem:[%s166 + $0x24] sm:$0xf]
      %v185 = vld [vmem:[%s166 + $0x28] sm:$0xf]
      %v186 = vld [vmem:[%s166 + $0x2c] sm:$0xf]
      %v187 = vld [vmem:[%s166 + $0x30] sm:$0xf]
      %v188 = vld [vmem:[%s166 + $0x34] sm:$0xf]
      %v189 = vld [vmem:[%s166 + $0x38] sm:$0xf]
      %v190 = vld [vmem:[%s166 + $0x3c] sm:$0xf]
      %v191 = vld [vmem:[%s166 + $0x40] sm:$0xf]
      %v192 = vld [vmem:[%s166 + $0x44] sm:$0xf]
      %v193 = vld [vmem:[%s166 + $0x48] sm:$0xf]
      %v194 = vld [vmem:[%s166 + $0x4c] sm:$0xf]
      %v195 = vld [vmem:[%s166 + $0x50] sm:$0xf]
      %v196 = vld [vmem:[%s166 + $0x54] sm:$0xf]
      %v197 = vld [vmem:[%s166 + $0x58] sm:$0xf]
      %v198 = vld [vmem:[%s166 + $0x5c] sm:$0xf]
      %v199 = vld [vmem:[%s166 + $0x60] sm:$0xf]
      %v200 = vld [vmem:[%s166 + $0x64] sm:$0xf]
      %v201 = vld [vmem:[%s166 + $0x68] sm:$0xf]
      %v202 = vld [vmem:[%s166 + $0x6c] sm:$0xf]
      %v203 = vld [vmem:[%s166 + $0x70] sm:$0xf]
      %v204 = vld [vmem:[%s166 + $0x74] sm:$0xf]
      %v205 = vld [vmem:[%s166 + $0x78] sm:$0xf]
      %v206 = vld [vmem:[%s166 + $0x7c] sm:$0xf]
      %v207 = vld [vmem:[%s1] sm:$0xf]
      %v208 = vld [vmem:[%s1 + $0x4] sm:$0xf]
      %v209 = vld [vmem:[%s1 + $0x8] sm:$0xf]
      %v210 = vld [vmem:[%s1 + $0xc] sm:$0xf]
      %v211 = vld [vmem:[%s1 + $0x10] sm:$0xf]
      %v212 = vld [vmem:[%s1 + $0x14] sm:$0xf]
      %v213 = vld [vmem:[%s1 + $0x18] sm:$0xf]
      %v214 = vld [vmem:[%s1 + $0x1c] sm:$0xf]
      %v215 = vld [vmem:[%s1 + $0x20] sm:$0xf]
      %v216 = vld [vmem:[%s2] sm:$0x1]
      %v218 = vperm.slane %v216, 0
      %v252 = vunpack.c.l.b16 %v175
      %v253 = vunpack.c.l.b16 %v176
      %v254 = vunpack.c.l.b16 %v177
      %v255 = vunpack.c.l.b16 %v178
      %v256 = vunpack.c.l.b16 %v179
      %v257 = vunpack.c.l.b16 %v180
      %v258 = vunpack.c.l.b16 %v181
      %v259 = vunpack.c.l.b16 %v182
      %v260 = vunpack.c.l.b16 %v183
      %v261 = vunpack.c.l.b16 %v184
      %v262 = vunpack.c.l.b16 %v185
      %v263 = vunpack.c.l.b16 %v186
      %v264 = vunpack.c.l.b16 %v187
      %v265 = vunpack.c.l.b16 %v188
      %v266 = vunpack.c.l.b16 %v189
      %v267 = vunpack.c.l.b16 %v190
      %v268 = vunpack.c.l.b16 %v191
      %v269 = vunpack.c.l.b16 %v192
      %v270 = vunpack.c.l.b16 %v193
      %v271 = vunpack.c.l.b16 %v194
      %v272 = vunpack.c.l.b16 %v195
      %v273 = vunpack.c.l.b16 %v196
      %v274 = vunpack.c.l.b16 %v197
      %v275 = vunpack.c.l.b16 %v198
      %v276 = vunpack.c.l.b16 %v199
      %v277 = vunpack.c.l.b16 %v200
      %v278 = vunpack.c.l.b16 %v201
      %v279 = vunpack.c.l.b16 %v202
      %v280 = vunpack.c.l.b16 %v203
      %v281 = vunpack.c.l.b16 %v204
      %v282 = vunpack.c.l.b16 %v205
      %v283 = vunpack.c.l.b16 %v206
      %v284 = vpack.c.b16 %v253, %v252
      %v285 = vpack.c.b16 %v255, %v254
      %v286 = vpack.c.b16 %v257, %v256
      %v287 = vpack.c.b16 %v259, %v258
      %v288 = vpack.c.b16 %v261, %v260
      %v289 = vpack.c.b16 %v263, %v262
      %v290 = vpack.c.b16 %v265, %v264
      %v291 = vpack.c.b16 %v267, %v266
      %v292 = vpack.c.b16 %v269, %v268
      %v293 = vpack.c.b16 %v271, %v270
      %v294 = vpack.c.b16 %v273, %v272
      %v295 = vpack.c.b16 %v275, %v274
      %v296 = vpack.c.b16 %v277, %v276
      %v297 = vpack.c.b16 %v279, %v278
      %v298 = vpack.c.b16 %v281, %v280
      %v299 = vpack.c.b16 %v283, %v282
      %v309 = vunpack.c.l.b16 %v207
      %v310 = vunpack.c.l.b16 %v208
      %v311 = vunpack.c.l.b16 %v209
      %v312 = vunpack.c.l.b16 %v210
      %v313 = vunpack.c.l.b16 %v211
      %v314 = vunpack.c.l.b16 %v212
      %v315 = vunpack.c.l.b16 %v213
      %v316 = vunpack.c.l.b16 %v214
      %v317 = vunpack.c.l.b16 %v215
      %v318 = vpack.c.b16 %v310, %v309
      %v319 = vpack.c.b16 %v312, %v311
      %v320 = vpack.c.b16 %v314, %v313
      %v321 = vpack.c.b16 %v316, %v315
      %v322 = vpack.c.b16 %v317, %v317
      %vm327 = vcmask 588800
      %v329 = vsel %vm327, %v284, 0
      %v332 = vsel %vm327, %v285, 0
      %v335 = vsel %vm327, %v286, 0
      %v338 = vsel %vm327, %v287, 0
      %v341 = vsel %vm327, %v288, 0
      %v344 = vsel %vm327, %v289, 0
      %v347 = vsel %vm327, %v290, 0
      %v350 = vsel %vm327, %v291, 0
      %v353 = vsel %vm327, %v292, 0
      %v356 = vsel %vm327, %v293, 0
      %v359 = vsel %vm327, %v294, 0
      %v362 = vsel %vm327, %v295, 0
      %v365 = vsel %vm327, %v296, 0
      %v368 = vsel %vm327, %v297, 0
      %v371 = vsel %vm327, %v298, 0
      %v374 = vsel %vm327, %v299, 0
      %vm376 = vcmask 1043456
      %v378 = vsel %vm376, %v322, 0
      %380 = vmatpush.bf16.msra.mxu0 0
      %381 = vmatpush.bf16.msra.mxu0 0
      %382 = vmatpush.bf16.msra.mxu0 0
      %383 = vmatpush.bf16.msra.mxu0 %v378
      %384 = vmatpush.bf16.msra.mxu0 %v321
      %385 = vmatpush.bf16.msra.mxu0 %v320
      %386 = vmatpush.bf16.msra.mxu0 %v319
      %387 = vmatpush.bf16.msra.mxu0 %v318
      %388 = vmatmul.bf16.gmra.mxu0 %v329
      %v389 = vpop.f32.mrf.mxu0
      %v390 = vadd.f32 %v218, %v389
      %v391 = vpop.f32.mrf.mxu0
      %v392 = vadd.f32 %v218, %v391
      %393 = vmatmul.bf16.gmra.mxu0 %v332
      %v394 = vpop.f32.mrf.mxu0
      %v395 = vadd.f32 %v218, %v394
      %v396 = vpop.f32.mrf.mxu0
      %v397 = vadd.f32 %v218, %v396
      %398 = vmatmul.bf16.gmra.mxu0 %v335
      %v399 = vpop.f32.mrf.mxu0
      %v400 = vadd.f32 %v218, %v399
      %v401 = vpop.f32.mrf.mxu0
      %v402 = vadd.f32 %v218, %v401
      %403 = vmatmul.bf16.gmra.mxu0 %v338
      %v404 = vpop.f32.mrf.mxu0
      %v405 = vadd.f32 %v218, %v404
      %v406 = vpop.f32.mrf.mxu0
      %v407 = vadd.f32 %v218, %v406
      %408 = vmatmul.bf16.gmra.mxu0 %v341
      %v409 = vpop.f32.mrf.mxu0
      %v410 = vadd.f32 %v218, %v409
      %v411 = vpop.f32.mrf.mxu0
      %v412 = vadd.f32 %v218, %v411
      %413 = vmatmul.bf16.gmra.mxu0 %v344
      %v414 = vpop.f32.mrf.mxu0
      %v415 = vadd.f32 %v218, %v414
      %v416 = vpop.f32.mrf.mxu0
      %v417 = vadd.f32 %v218, %v416
      %418 = vmatmul.bf16.gmra.mxu0 %v347
      %v419 = vpop.f32.mrf.mxu0
      %v420 = vadd.f32 %v218, %v419
      %v421 = vpop.f32.mrf.mxu0
      %v422 = vadd.f32 %v218, %v421
      %423 = vmatmul.bf16.gmra.mxu0 %v350
      %v424 = vpop.f32.mrf.mxu0
      %v425 = vadd.f32 %v218, %v424
      %v426 = vpop.f32.mrf.mxu0
      %v427 = vadd.f32 %v218, %v426
      %428 = vmatmul.bf16.gmra.mxu0 %v353
      %v429 = vpop.f32.mrf.mxu0
      %v430 = vadd.f32 %v218, %v429
      %v431 = vpop.f32.mrf.mxu0
      %v432 = vadd.f32 %v218, %v431
      %433 = vmatmul.bf16.gmra.mxu0 %v356
      %v434 = vpop.f32.mrf.mxu0
      %v435 = vadd.f32 %v218, %v434
      %v436 = vpop.f32.mrf.mxu0
      %v437 = vadd.f32 %v218, %v436
      %438 = vmatmul.bf16.gmra.mxu0 %v359
      %v439 = vpop.f32.mrf.mxu0
      %v440 = vadd.f32 %v218, %v439
      %v441 = vpop.f32.mrf.mxu0
      %v442 = vadd.f32 %v218, %v441
      %443 = vmatmul.bf16.gmra.mxu0 %v362
      %v444 = vpop.f32.mrf.mxu0
      %v445 = vadd.f32 %v218, %v444
      %v446 = vpop.f32.mrf.mxu0
      %v447 = vadd.f32 %v218, %v446
      %448 = vmatmul.bf16.gmra.mxu0 %v365
      %v449 = vpop.f32.mrf.mxu0
      %v450 = vadd.f32 %v218, %v449
      %v451 = vpop.f32.mrf.mxu0
      %v452 = vadd.f32 %v218, %v451
      %453 = vmatmul.bf16.gmra.mxu0 %v368
      %v454 = vpop.f32.mrf.mxu0
      %v455 = vadd.f32 %v218, %v454
      %v456 = vpop.f32.mrf.mxu0
      %v457 = vadd.f32 %v218, %v456
      %458 = vmatmul.bf16.gmra.mxu0 %v371
      %v459 = vpop.f32.mrf.mxu0
      %v460 = vadd.f32 %v218, %v459
      %v461 = vpop.f32.mrf.mxu0
      %v462 = vadd.f32 %v218, %v461
      %463 = vmatmul.bf16.gmra.mxu0 %v374
      %v464 = vpop.f32.mrf.mxu0
      %v465 = vadd.f32 %v218, %v464
      %v466 = vpop.f32.mrf.mxu0
      %v467 = vadd.f32 %v218, %v466
      %468 = vdwg.mxu0
      %v469 = vxor.u32 %v390, 2147483648
      %v470 = vxor.u32 %v392, 2147483648
      %v471 = vxor.u32 %v395, 2147483648
      %v472 = vxor.u32 %v397, 2147483648
      %v473 = vxor.u32 %v400, 2147483648
      %v474 = vxor.u32 %v402, 2147483648
      %v475 = vxor.u32 %v405, 2147483648
      %v476 = vxor.u32 %v407, 2147483648
      %v477 = vxor.u32 %v410, 2147483648
      %v478 = vxor.u32 %v412, 2147483648
      %v479 = vxor.u32 %v415, 2147483648
      %v480 = vxor.u32 %v417, 2147483648
      %v481 = vxor.u32 %v420, 2147483648
      %v482 = vxor.u32 %v422, 2147483648
      %v483 = vxor.u32 %v425, 2147483648
      %v484 = vxor.u32 %v427, 2147483648
      %v485 = vxor.u32 %v430, 2147483648
      %v486 = vxor.u32 %v432, 2147483648
      %v487 = vxor.u32 %v435, 2147483648
      %v488 = vxor.u32 %v437, 2147483648
      %v489 = vxor.u32 %v440, 2147483648
      %v490 = vxor.u32 %v442, 2147483648
      %v491 = vxor.u32 %v445, 2147483648
      %v492 = vxor.u32 %v447, 2147483648
      %v493 = vxor.u32 %v450, 2147483648
      %v494 = vxor.u32 %v452, 2147483648
      %v495 = vxor.u32 %v455, 2147483648
      %v496 = vxor.u32 %v457, 2147483648
      %v497 = vxor.u32 %v460, 2147483648
      %v498 = vxor.u32 %v462, 2147483648
      %v499 = vxor.u32 %v465, 2147483648
      %v500 = vxor.u32 %v467, 2147483648
      %v501 = vmul.f32 %v469, 1.442695
      %v502 = vpow.pop %v501
      %v503 = vmul.f32 %v470, 1.442695
      %v504 = vpow.pop %v503
      %v505 = vmul.f32 %v471, 1.442695
      %v506 = vpow.pop %v505
      %v507 = vmul.f32 %v472, 1.442695
      %v508 = vpow.pop %v507
      %v509 = vmul.f32 %v473, 1.442695
      %v510 = vpow.pop %v509
      %v511 = vmul.f32 %v474, 1.442695
      %v512 = vpow.pop %v511
      %v513 = vmul.f32 %v475, 1.442695
      %v514 = vpow.pop %v513
      %v515 = vmul.f32 %v476, 1.442695
      %v516 = vpow.pop %v515
      %v517 = vmul.f32 %v477, 1.442695
      %v518 = vpow.pop %v517
      %v519 = vmul.f32 %v478, 1.442695
      %v520 = vpow.pop %v519
      %v521 = vmul.f32 %v479, 1.442695
      %v522 = vpow.pop %v521
      %v523 = vmul.f32 %v480, 1.442695
      %v524 = vpow.pop %v523
      %v525 = vmul.f32 %v481, 1.442695
      %v526 = vpow.pop %v525
      %v527 = vmul.f32 %v482, 1.442695
      %v528 = vpow.pop %v527
      %v529 = vmul.f32 %v483, 1.442695
      %v530 = vpow.pop %v529
      %v531 = vmul.f32 %v484, 1.442695
      %v532 = vpow.pop %v531
      %v533 = vmul.f32 %v485, 1.442695
      %v534 = vpow.pop %v533
      %v535 = vmul.f32 %v486, 1.442695
      %v536 = vpow.pop %v535
      %v537 = vmul.f32 %v487, 1.442695
      %v538 = vpow.pop %v537
      %v539 = vmul.f32 %v488, 1.442695
      %v540 = vpow.pop %v539
      %v541 = vmul.f32 %v489, 1.442695
      %v542 = vpow.pop %v541
      %v543 = vmul.f32 %v490, 1.442695
      %v544 = vpow.pop %v543
      %v545 = vmul.f32 %v491, 1.442695
      %v546 = vpow.pop %v545
      %v547 = vmul.f32 %v492, 1.442695
      %v548 = vpow.pop %v547
      %v549 = vmul.f32 %v493, 1.442695
      %v550 = vpow.pop %v549
      %v551 = vmul.f32 %v494, 1.442695
      %v552 = vpow.pop %v551
      %v553 = vmul.f32 %v495, 1.442695
      %v554 = vpow.pop %v553
      %v555 = vmul.f32 %v496, 1.442695
      %v556 = vpow.pop %v555
      %v557 = vmul.f32 %v497, 1.442695
      %v558 = vpow.pop %v557
      %v559 = vmul.f32 %v498, 1.442695
      %v560 = vpow.pop %v559
      %v561 = vmul.f32 %v499, 1.442695
      %v562 = vpow.pop %v561
      %v563 = vmul.f32 %v500, 1.442695
      %v564 = vpow.pop %v563
      %v565 = vadd.f32 %v502, 1.0
      %v566 = vadd.f32 %v504, 1.0
      %v567 = vadd.f32 %v506, 1.0
      %v568 = vadd.f32 %v508, 1.0
      %v569 = vadd.f32 %v510, 1.0
      %v570 = vadd.f32 %v512, 1.0
      %v571 = vadd.f32 %v514, 1.0
      %v572 = vadd.f32 %v516, 1.0
      %v573 = vadd.f32 %v518, 1.0
      %v574 = vadd.f32 %v520, 1.0
      %v575 = vadd.f32 %v522, 1.0
      %v576 = vadd.f32 %v524, 1.0
      %v577 = vadd.f32 %v526, 1.0
      %v578 = vadd.f32 %v528, 1.0
      %v579 = vadd.f32 %v530, 1.0
      %v580 = vadd.f32 %v532, 1.0
      %v581 = vadd.f32 %v534, 1.0
      %v582 = vadd.f32 %v536, 1.0
      %v583 = vadd.f32 %v538, 1.0
      %v584 = vadd.f32 %v540, 1.0
      %v585 = vadd.f32 %v542, 1.0
      %v586 = vadd.f32 %v544, 1.0
      %v587 = vadd.f32 %v546, 1.0
      %v588 = vadd.f32 %v548, 1.0
      %v589 = vadd.f32 %v550, 1.0
      %v590 = vadd.f32 %v552, 1.0
      %v591 = vadd.f32 %v554, 1.0
      %v592 = vadd.f32 %v556, 1.0
      %v593 = vadd.f32 %v558, 1.0
      %v594 = vadd.f32 %v560, 1.0
      %v595 = vadd.f32 %v562, 1.0
      %v596 = vadd.f32 %v564, 1.0
      %v597 = vrcp.pop %v565
      %v598 = vmul.f32 %v565, %v597
      %v599 = vsub.f32 1.0, %v598
      %v600 = vmul.f32 %v597, %v599
      %v601 = vadd.f32 %v597, %v600
      %vm602 = vweird.f32 %v565
      %vm603 = vweird.f32 %v597
      %vm604 = vmor %vm602, %vm603
      %v605 = vsel %vm604, %v597, %v601
      %v606 = vand.u32 2147483647, %v565
      %vm607 = vcmp.eq.f32.partialorder %v606, 8.507059e+37
      %v608 = vand.u32 %v565, 2147483648
      %v609 = vor.u32 1.1754944e-38, %v608
      %v610 = vsel %vm607, %v609, %v605
      %v611 = vmul.f32 1.0, %v610
      %v612 = vrcp.pop %v566
      %v613 = vmul.f32 %v566, %v612
      %v614 = vsub.f32 1.0, %v613
      %v615 = vmul.f32 %v612, %v614
      %v616 = vadd.f32 %v612, %v615
      %vm617 = vweird.f32 %v566
      %vm618 = vweird.f32 %v612
      %vm619 = vmor %vm617, %vm618
      %v620 = vsel %vm619, %v612, %v616
      %v621 = vand.u32 2147483647, %v566
      %vm622 = vcmp.eq.f32.partialorder %v621, 8.507059e+37
      %v623 = vand.u32 %v566, 2147483648
      %v624 = vor.u32 1.1754944e-38, %v623
      %v625 = vsel %vm622, %v624, %v620
      %v626 = vmul.f32 1.0, %v625
      %v627 = vrcp.pop %v567
      %v628 = vmul.f32 %v567, %v627
      %v629 = vsub.f32 1.0, %v628
      %v630 = vmul.f32 %v627, %v629
      %v631 = vadd.f32 %v627, %v630
      %vm632 = vweird.f32 %v567
      %vm633 = vweird.f32 %v627
      %vm634 = vmor %vm632, %vm633
      %v635 = vsel %vm634, %v627, %v631
      %v636 = vand.u32 2147483647, %v567
      %vm637 = vcmp.eq.f32.partialorder %v636, 8.507059e+37
      %v638 = vand.u32 %v567, 2147483648
      %v639 = vor.u32 1.1754944e-38, %v638
      %v640 = vsel %vm637, %v639, %v635
      %v641 = vmul.f32 1.0, %v640
      %v642 = vrcp.pop %v568
      %v643 = vmul.f32 %v568, %v642
      %v644 = vsub.f32 1.0, %v643
      %v645 = vmul.f32 %v642, %v644
      %v646 = vadd.f32 %v642, %v645
      %vm647 = vweird.f32 %v568
      %vm648 = vweird.f32 %v642
      %vm649 = vmor %vm647, %vm648
      %v650 = vsel %vm649, %v642, %v646
      %v651 = vand.u32 2147483647, %v568
      %vm652 = vcmp.eq.f32.partialorder %v651, 8.507059e+37
      %v653 = vand.u32 %v568, 2147483648
      %v654 = vor.u32 1.1754944e-38, %v653
      %v655 = vsel %vm652, %v654, %v650
      %v656 = vmul.f32 1.0, %v655
      %v657 = vrcp.pop %v569
      %v658 = vmul.f32 %v569, %v657
      %v659 = vsub.f32 1.0, %v658
      %v660 = vmul.f32 %v657, %v659
      %v661 = vadd.f32 %v657, %v660
      %vm662 = vweird.f32 %v569
      %vm663 = vweird.f32 %v657
      %vm664 = vmor %vm662, %vm663
      %v665 = vsel %vm664, %v657, %v661
      %v666 = vand.u32 2147483647, %v569
      %vm667 = vcmp.eq.f32.partialorder %v666, 8.507059e+37
      %v668 = vand.u32 %v569, 2147483648
      %v669 = vor.u32 1.1754944e-38, %v668
      %v670 = vsel %vm667, %v669, %v665
      %v671 = vmul.f32 1.0, %v670
      %v672 = vrcp.pop %v570
      %v673 = vmul.f32 %v570, %v672
      %v674 = vsub.f32 1.0, %v673
      %v675 = vmul.f32 %v672, %v674
      %v676 = vadd.f32 %v672, %v675
      %vm677 = vweird.f32 %v570
      %vm678 = vweird.f32 %v672
      %vm679 = vmor %vm677, %vm678
      %v680 = vsel %vm679, %v672, %v676
      %v681 = vand.u32 2147483647, %v570
      %vm682 = vcmp.eq.f32.partialorder %v681, 8.507059e+37
      %v683 = vand.u32 %v570, 2147483648
      %v684 = vor.u32 1.1754944e-38, %v683
      %v685 = vsel %vm682, %v684, %v680
      %v686 = vmul.f32 1.0, %v685
      %v687 = vrcp.pop %v571
      %v688 = vmul.f32 %v571, %v687
      %v689 = vsub.f32 1.0, %v688
      %v690 = vmul.f32 %v687, %v689
      %v691 = vadd.f32 %v687, %v690
      %vm692 = vweird.f32 %v571
      %vm693 = vweird.f32 %v687
      %vm694 = vmor %vm692, %vm693
      %v695 = vsel %vm694, %v687, %v691
      %v696 = vand.u32 2147483647, %v571
      %vm697 = vcmp.eq.f32.partialorder %v696, 8.507059e+37
      %v698 = vand.u32 %v571, 2147483648
      %v699 = vor.u32 1.1754944e-38, %v698
      %v700 = vsel %vm697, %v699, %v695
      %v701 = vmul.f32 1.0, %v700
      %v702 = vrcp.pop %v572
      %v703 = vmul.f32 %v572, %v702
      %v704 = vsub.f32 1.0, %v703
      %v705 = vmul.f32 %v702, %v704
      %v706 = vadd.f32 %v702, %v705
      %vm707 = vweird.f32 %v572
      %vm708 = vweird.f32 %v702
      %vm709 = vmor %vm707, %vm708
      %v710 = vsel %vm709, %v702, %v706
      %v711 = vand.u32 2147483647, %v572
      %vm712 = vcmp.eq.f32.partialorder %v711, 8.507059e+37
      %v713 = vand.u32 %v572, 2147483648
      %v714 = vor.u32 1.1754944e-38, %v713
      %v715 = vsel %vm712, %v714, %v710
      %v716 = vmul.f32 1.0, %v715
      %v717 = vrcp.pop %v573
      %v718 = vmul.f32 %v573, %v717
      %v719 = vsub.f32 1.0, %v718
      %v720 = vmul.f32 %v717, %v719
      %v721 = vadd.f32 %v717, %v720
      %vm722 = vweird.f32 %v573
      %vm723 = vweird.f32 %v717
      %vm724 = vmor %vm722, %vm723
      %v725 = vsel %vm724, %v717, %v721
      %v726 = vand.u32 2147483647, %v573
      %vm727 = vcmp.eq.f32.partialorder %v726, 8.507059e+37
      %v728 = vand.u32 %v573, 2147483648
      %v729 = vor.u32 1.1754944e-38, %v728
      %v730 = vsel %vm727, %v729, %v725
      %v731 = vmul.f32 1.0, %v730
      %v732 = vrcp.pop %v574
      %v733 = vmul.f32 %v574, %v732
      %v734 = vsub.f32 1.0, %v733
      %v735 = vmul.f32 %v732, %v734
      %v736 = vadd.f32 %v732, %v735
      %vm737 = vweird.f32 %v574
      %vm738 = vweird.f32 %v732
      %vm739 = vmor %vm737, %vm738
      %v740 = vsel %vm739, %v732, %v736
      %v741 = vand.u32 2147483647, %v574
      %vm742 = vcmp.eq.f32.partialorder %v741, 8.507059e+37
      %v743 = vand.u32 %v574, 2147483648
      %v744 = vor.u32 1.1754944e-38, %v743
      %v745 = vsel %vm742, %v744, %v740
      %v746 = vmul.f32 1.0, %v745
      %v747 = vrcp.pop %v575
      %v748 = vmul.f32 %v575, %v747
      %v749 = vsub.f32 1.0, %v748
      %v750 = vmul.f32 %v747, %v749
      %v751 = vadd.f32 %v747, %v750
      %vm752 = vweird.f32 %v575
      %vm753 = vweird.f32 %v747
      %vm754 = vmor %vm752, %vm753
      %v755 = vsel %vm754, %v747, %v751
      %v756 = vand.u32 2147483647, %v575
      %vm757 = vcmp.eq.f32.partialorder %v756, 8.507059e+37
      %v758 = vand.u32 %v575, 2147483648
      %v759 = vor.u32 1.1754944e-38, %v758
      %v760 = vsel %vm757, %v759, %v755
      %v761 = vmul.f32 1.0, %v760
      %v762 = vrcp.pop %v576
      %v763 = vmul.f32 %v576, %v762
      %v764 = vsub.f32 1.0, %v763
      %v765 = vmul.f32 %v762, %v764
      %v766 = vadd.f32 %v762, %v765
      %vm767 = vweird.f32 %v576
      %vm768 = vweird.f32 %v762
      %vm769 = vmor %vm767, %vm768
      %v770 = vsel %vm769, %v762, %v766
      %v771 = vand.u32 2147483647, %v576
      %vm772 = vcmp.eq.f32.partialorder %v771, 8.507059e+37
      %v773 = vand.u32 %v576, 2147483648
      %v774 = vor.u32 1.1754944e-38, %v773
      %v775 = vsel %vm772, %v774, %v770
      %v776 = vmul.f32 1.0, %v775
      %v777 = vrcp.pop %v577
      %v778 = vmul.f32 %v577, %v777
      %v779 = vsub.f32 1.0, %v778
      %v780 = vmul.f32 %v777, %v779
      %v781 = vadd.f32 %v777, %v780
      %vm782 = vweird.f32 %v577
      %vm783 = vweird.f32 %v777
      %vm784 = vmor %vm782, %vm783
      %v785 = vsel %vm784, %v777, %v781
      %v786 = vand.u32 2147483647, %v577
      %vm787 = vcmp.eq.f32.partialorder %v786, 8.507059e+37
      %v788 = vand.u32 %v577, 2147483648
      %v789 = vor.u32 1.1754944e-38, %v788
      %v790 = vsel %vm787, %v789, %v785
      %v791 = vmul.f32 1.0, %v790
      %v792 = vrcp.pop %v578
      %v793 = vmul.f32 %v578, %v792
      %v794 = vsub.f32 1.0, %v793
      %v795 = vmul.f32 %v792, %v794
      %v796 = vadd.f32 %v792, %v795
      %vm797 = vweird.f32 %v578
      %vm798 = vweird.f32 %v792
      %vm799 = vmor %vm797, %vm798
      %v800 = vsel %vm799, %v792, %v796
      %v801 = vand.u32 2147483647, %v578
      %vm802 = vcmp.eq.f32.partialorder %v801, 8.507059e+37
      %v803 = vand.u32 %v578, 2147483648
      %v804 = vor.u32 1.1754944e-38, %v803
      %v805 = vsel %vm802, %v804, %v800
      %v806 = vmul.f32 1.0, %v805
      %v807 = vrcp.pop %v579
      %v808 = vmul.f32 %v579, %v807
      %v809 = vsub.f32 1.0, %v808
      %v810 = vmul.f32 %v807, %v809
      %v811 = vadd.f32 %v807, %v810
      %vm812 = vweird.f32 %v579
      %vm813 = vweird.f32 %v807
      %vm814 = vmor %vm812, %vm813
      %v815 = vsel %vm814, %v807, %v811
      %v816 = vand.u32 2147483647, %v579
      %vm817 = vcmp.eq.f32.partialorder %v816, 8.507059e+37
      %v818 = vand.u32 %v579, 2147483648
      %v819 = vor.u32 1.1754944e-38, %v818
      %v820 = vsel %vm817, %v819, %v815
      %v821 = vmul.f32 1.0, %v820
      %v822 = vrcp.pop %v580
      %v823 = vmul.f32 %v580, %v822
      %v824 = vsub.f32 1.0, %v823
      %v825 = vmul.f32 %v822, %v824
      %v826 = vadd.f32 %v822, %v825
      %vm827 = vweird.f32 %v580
      %vm828 = vweird.f32 %v822
      %vm829 = vmor %vm827, %vm828
      %v830 = vsel %vm829, %v822, %v826
      %v831 = vand.u32 2147483647, %v580
      %vm832 = vcmp.eq.f32.partialorder %v831, 8.507059e+37
      %v833 = vand.u32 %v580, 2147483648
      %v834 = vor.u32 1.1754944e-38, %v833
      %v835 = vsel %vm832, %v834, %v830
      %v836 = vmul.f32 1.0, %v835
      %v837 = vrcp.pop %v581
      %v838 = vmul.f32 %v581, %v837
      %v839 = vsub.f32 1.0, %v838
      %v840 = vmul.f32 %v837, %v839
      %v841 = vadd.f32 %v837, %v840
      %vm842 = vweird.f32 %v581
      %vm843 = vweird.f32 %v837
      %vm844 = vmor %vm842, %vm843
      %v845 = vsel %vm844, %v837, %v841
      %v846 = vand.u32 2147483647, %v581
      %vm847 = vcmp.eq.f32.partialorder %v846, 8.507059e+37
      %v848 = vand.u32 %v581, 2147483648
      %v849 = vor.u32 1.1754944e-38, %v848
      %v850 = vsel %vm847, %v849, %v845
      %v851 = vmul.f32 1.0, %v850
      %v852 = vrcp.pop %v582
      %v853 = vmul.f32 %v582, %v852
      %v854 = vsub.f32 1.0, %v853
      %v855 = vmul.f32 %v852, %v854
      %v856 = vadd.f32 %v852, %v855
      %vm857 = vweird.f32 %v582
      %vm858 = vweird.f32 %v852
      %vm859 = vmor %vm857, %vm858
      %v860 = vsel %vm859, %v852, %v856
      %v861 = vand.u32 2147483647, %v582
      %vm862 = vcmp.eq.f32.partialorder %v861, 8.507059e+37
      %v863 = vand.u32 %v582, 2147483648
      %v864 = vor.u32 1.1754944e-38, %v863
      %v865 = vsel %vm862, %v864, %v860
      %v866 = vmul.f32 1.0, %v865
      %v867 = vrcp.pop %v583
      %v868 = vmul.f32 %v583, %v867
      %v869 = vsub.f32 1.0, %v868
      %v870 = vmul.f32 %v867, %v869
      %v871 = vadd.f32 %v867, %v870
      %vm872 = vweird.f32 %v583
      %vm873 = vweird.f32 %v867
      %vm874 = vmor %vm872, %vm873
      %v875 = vsel %vm874, %v867, %v871
      %v876 = vand.u32 2147483647, %v583
      %vm877 = vcmp.eq.f32.partialorder %v876, 8.507059e+37
      %v878 = vand.u32 %v583, 2147483648
      %v879 = vor.u32 1.1754944e-38, %v878
      %v880 = vsel %vm877, %v879, %v875
      %v881 = vmul.f32 1.0, %v880
      %v882 = vrcp.pop %v584
      %v883 = vmul.f32 %v584, %v882
      %v884 = vsub.f32 1.0, %v883
      %v885 = vmul.f32 %v882, %v884
      %v886 = vadd.f32 %v882, %v885
      %vm887 = vweird.f32 %v584
      %vm888 = vweird.f32 %v882
      %vm889 = vmor %vm887, %vm888
      %v890 = vsel %vm889, %v882, %v886
      %v891 = vand.u32 2147483647, %v584
      %vm892 = vcmp.eq.f32.partialorder %v891, 8.507059e+37
      %v893 = vand.u32 %v584, 2147483648
      %v894 = vor.u32 1.1754944e-38, %v893
      %v895 = vsel %vm892, %v894, %v890
      %v896 = vmul.f32 1.0, %v895
      %v897 = vrcp.pop %v585
      %v898 = vmul.f32 %v585, %v897
      %v899 = vsub.f32 1.0, %v898
      %v900 = vmul.f32 %v897, %v899
      %v901 = vadd.f32 %v897, %v900
      %vm902 = vweird.f32 %v585
      %vm903 = vweird.f32 %v897
      %vm904 = vmor %vm902, %vm903
      %v905 = vsel %vm904, %v897, %v901
      %v906 = vand.u32 2147483647, %v585
      %vm907 = vcmp.eq.f32.partialorder %v906, 8.507059e+37
      %v908 = vand.u32 %v585, 2147483648
      %v909 = vor.u32 1.1754944e-38, %v908
      %v910 = vsel %vm907, %v909, %v905
      %v911 = vmul.f32 1.0, %v910
      %v912 = vrcp.pop %v586
      %v913 = vmul.f32 %v586, %v912
      %v914 = vsub.f32 1.0, %v913
      %v915 = vmul.f32 %v912, %v914
      %v916 = vadd.f32 %v912, %v915
      %vm917 = vweird.f32 %v586
      %vm918 = vweird.f32 %v912
      %vm919 = vmor %vm917, %vm918
      %v920 = vsel %vm919, %v912, %v916
      %v921 = vand.u32 2147483647, %v586
      %vm922 = vcmp.eq.f32.partialorder %v921, 8.507059e+37
      %v923 = vand.u32 %v586, 2147483648
      %v924 = vor.u32 1.1754944e-38, %v923
      %v925 = vsel %vm922, %v924, %v920
      %v926 = vmul.f32 1.0, %v925
      %v927 = vrcp.pop %v587
      %v928 = vmul.f32 %v587, %v927
      %v929 = vsub.f32 1.0, %v928
      %v930 = vmul.f32 %v927, %v929
      %v931 = vadd.f32 %v927, %v930
      %vm932 = vweird.f32 %v587
      %vm933 = vweird.f32 %v927
      %vm934 = vmor %vm932, %vm933
      %v935 = vsel %vm934, %v927, %v931
      %v936 = vand.u32 2147483647, %v587
      %vm937 = vcmp.eq.f32.partialorder %v936, 8.507059e+37
      %v938 = vand.u32 %v587, 2147483648
      %v939 = vor.u32 1.1754944e-38, %v938
      %v940 = vsel %vm937, %v939, %v935
      %v941 = vmul.f32 1.0, %v940
      %v942 = vrcp.pop %v588
      %v943 = vmul.f32 %v588, %v942
      %v944 = vsub.f32 1.0, %v943
      %v945 = vmul.f32 %v942, %v944
      %v946 = vadd.f32 %v942, %v945
      %vm947 = vweird.f32 %v588
      %vm948 = vweird.f32 %v942
      %vm949 = vmor %vm947, %vm948
      %v950 = vsel %vm949, %v942, %v946
      %v951 = vand.u32 2147483647, %v588
      %vm952 = vcmp.eq.f32.partialorder %v951, 8.507059e+37
      %v953 = vand.u32 %v588, 2147483648
      %v954 = vor.u32 1.1754944e-38, %v953
      %v955 = vsel %vm952, %v954, %v950
      %v956 = vmul.f32 1.0, %v955
      %v957 = vrcp.pop %v589
      %v958 = vmul.f32 %v589, %v957
      %v959 = vsub.f32 1.0, %v958
      %v960 = vmul.f32 %v957, %v959
      %v961 = vadd.f32 %v957, %v960
      %vm962 = vweird.f32 %v589
      %vm963 = vweird.f32 %v957
      %vm964 = vmor %vm962, %vm963
      %v965 = vsel %vm964, %v957, %v961
      %v966 = vand.u32 2147483647, %v589
      %vm967 = vcmp.eq.f32.partialorder %v966, 8.507059e+37
      %v968 = vand.u32 %v589, 2147483648
      %v969 = vor.u32 1.1754944e-38, %v968
      %v970 = vsel %vm967, %v969, %v965
      %v971 = vmul.f32 1.0, %v970
      %v972 = vrcp.pop %v590
      %v973 = vmul.f32 %v590, %v972
      %v974 = vsub.f32 1.0, %v973
      %v975 = vmul.f32 %v972, %v974
      %v976 = vadd.f32 %v972, %v975
      %vm977 = vweird.f32 %v590
      %vm978 = vweird.f32 %v972
      %vm979 = vmor %vm977, %vm978
      %v980 = vsel %vm979, %v972, %v976
      %v981 = vand.u32 2147483647, %v590
      %vm982 = vcmp.eq.f32.partialorder %v981, 8.507059e+37
      %v983 = vand.u32 %v590, 2147483648
      %v984 = vor.u32 1.1754944e-38, %v983
      %v985 = vsel %vm982, %v984, %v980
      %v986 = vmul.f32 1.0, %v985
      %v987 = vrcp.pop %v591
      %v988 = vmul.f32 %v591, %v987
      %v989 = vsub.f32 1.0, %v988
      %v990 = vmul.f32 %v987, %v989
      %v991 = vadd.f32 %v987, %v990
      %vm992 = vweird.f32 %v591
      %vm993 = vweird.f32 %v987
      %vm994 = vmor %vm992, %vm993
      %v995 = vsel %vm994, %v987, %v991
      %v996 = vand.u32 2147483647, %v591
      %vm997 = vcmp.eq.f32.partialorder %v996, 8.507059e+37
      %v998 = vand.u32 %v591, 2147483648
      %v999 = vor.u32 1.1754944e-38, %v998
      %v1000 = vsel %vm997, %v999, %v995
      %v1001 = vmul.f32 1.0, %v1000
      %v1002 = vrcp.pop %v592
      %v1003 = vmul.f32 %v592, %v1002
      %v1004 = vsub.f32 1.0, %v1003
      %v1005 = vmul.f32 %v1002, %v1004
      %v1006 = vadd.f32 %v1002, %v1005
      %vm1007 = vweird.f32 %v592
      %vm1008 = vweird.f32 %v1002
      %vm1009 = vmor %vm1007, %vm1008
      %v1010 = vsel %vm1009, %v1002, %v1006
      %v1011 = vand.u32 2147483647, %v592
      %vm1012 = vcmp.eq.f32.partialorder %v1011, 8.507059e+37
      %v1013 = vand.u32 %v592, 2147483648
      %v1014 = vor.u32 1.1754944e-38, %v1013
      %v1015 = vsel %vm1012, %v1014, %v1010
      %v1016 = vmul.f32 1.0, %v1015
      %v1017 = vrcp.pop %v593
      %v1018 = vmul.f32 %v593, %v1017
      %v1019 = vsub.f32 1.0, %v1018
      %v1020 = vmul.f32 %v1017, %v1019
      %v1021 = vadd.f32 %v1017, %v1020
      %vm1022 = vweird.f32 %v593
      %vm1023 = vweird.f32 %v1017
      %vm1024 = vmor %vm1022, %vm1023
      %v1025 = vsel %vm1024, %v1017, %v1021
      %v1026 = vand.u32 2147483647, %v593
      %vm1027 = vcmp.eq.f32.partialorder %v1026, 8.507059e+37
      %v1028 = vand.u32 %v593, 2147483648
      %v1029 = vor.u32 1.1754944e-38, %v1028
      %v1030 = vsel %vm1027, %v1029, %v1025
      %v1031 = vmul.f32 1.0, %v1030
      %v1032 = vrcp.pop %v594
      %v1033 = vmul.f32 %v594, %v1032
      %v1034 = vsub.f32 1.0, %v1033
      %v1035 = vmul.f32 %v1032, %v1034
      %v1036 = vadd.f32 %v1032, %v1035
      %vm1037 = vweird.f32 %v594
      %vm1038 = vweird.f32 %v1032
      %vm1039 = vmor %vm1037, %vm1038
      %v1040 = vsel %vm1039, %v1032, %v1036
      %v1041 = vand.u32 2147483647, %v594
      %vm1042 = vcmp.eq.f32.partialorder %v1041, 8.507059e+37
      %v1043 = vand.u32 %v594, 2147483648
      %v1044 = vor.u32 1.1754944e-38, %v1043
      %v1045 = vsel %vm1042, %v1044, %v1040
      %v1046 = vmul.f32 1.0, %v1045
      %v1047 = vrcp.pop %v595
      %v1048 = vmul.f32 %v595, %v1047
      %v1049 = vsub.f32 1.0, %v1048
      %v1050 = vmul.f32 %v1047, %v1049
      %v1051 = vadd.f32 %v1047, %v1050
      %vm1052 = vweird.f32 %v595
      %vm1053 = vweird.f32 %v1047
      %vm1054 = vmor %vm1052, %vm1053
      %v1055 = vsel %vm1054, %v1047, %v1051
      %v1056 = vand.u32 2147483647, %v595
      %vm1057 = vcmp.eq.f32.partialorder %v1056, 8.507059e+37
      %v1058 = vand.u32 %v595, 2147483648
      %v1059 = vor.u32 1.1754944e-38, %v1058
      %v1060 = vsel %vm1057, %v1059, %v1055
      %v1061 = vmul.f32 1.0, %v1060
      %v1062 = vrcp.pop %v596
      %v1063 = vmul.f32 %v596, %v1062
      %v1064 = vsub.f32 1.0, %v1063
      %v1065 = vmul.f32 %v1062, %v1064
      %v1066 = vadd.f32 %v1062, %v1065
      %vm1067 = vweird.f32 %v596
      %vm1068 = vweird.f32 %v1062
      %vm1069 = vmor %vm1067, %vm1068
      %v1070 = vsel %vm1069, %v1062, %v1066
      %v1071 = vand.u32 2147483647, %v596
      %vm1072 = vcmp.eq.f32.partialorder %v1071, 8.507059e+37
      %v1073 = vand.u32 %v596, 2147483648
      %v1074 = vor.u32 1.1754944e-38, %v1073
      %v1075 = vsel %vm1072, %v1074, %v1070
      %v1076 = vmul.f32 1.0, %v1075
      %1077 = vst [vmem:[%s172] sm:$0xff] %v611
      %1078 = vst [vmem:[%s172 + $0x8] sm:$0xff] %v626
      %1079 = vst [vmem:[%s172 + $0x10] sm:$0xff] %v641
      %1080 = vst [vmem:[%s172 + $0x18] sm:$0xff] %v656
      %1081 = vst [vmem:[%s172 + $0x20] sm:$0xff] %v671
      %1082 = vst [vmem:[%s172 + $0x28] sm:$0xff] %v686
      %1083 = vst [vmem:[%s172 + $0x30] sm:$0xff] %v701
      %1084 = vst [vmem:[%s172 + $0x38] sm:$0xff] %v716
      %1085 = vst [vmem:[%s172 + $0x40] sm:$0xff] %v731
      %1086 = vst [vmem:[%s172 + $0x48] sm:$0xff] %v746
      %1087 = vst [vmem:[%s172 + $0x50] sm:$0xff] %v761
      %1088 = vst [vmem:[%s172 + $0x58] sm:$0xff] %v776
      %1089 = vst [vmem:[%s172 + $0x60] sm:$0xff] %v791
      %1090 = vst [vmem:[%s172 + $0x68] sm:$0xff] %v806
      %1091 = vst [vmem:[%s172 + $0x70] sm:$0xff] %v821
      %1092 = vst [vmem:[%s172 + $0x78] sm:$0xff] %v836
      %1093 = vst [vmem:[%s172 + $0x80] sm:$0xff] %v851
      %1094 = vst [vmem:[%s172 + $0x88] sm:$0xff] %v866
      %1095 = vst [vmem:[%s172 + $0x90] sm:$0xff] %v881
      %1096 = vst [vmem:[%s172 + $0x98] sm:$0xff] %v896
      %1097 = vst [vmem:[%s172 + $0xa0] sm:$0xff] %v911
      %1098 = vst [vmem:[%s172 + $0xa8] sm:$0xff] %v926
      %1099 = vst [vmem:[%s172 + $0xb0] sm:$0xff] %v941
      %1100 = vst [vmem:[%s172 + $0xb8] sm:$0xff] %v956
      %1101 = vst [vmem:[%s172 + $0xc0] sm:$0xff] %v971
      %1102 = vst [vmem:[%s172 + $0xc8] sm:$0xff] %v986
      %1103 = vst [vmem:[%s172 + $0xd0] sm:$0xff] %v1001
      %1104 = vst [vmem:[%s172 + $0xd8] sm:$0xff] %v1016
      %1105 = vst [vmem:[%s172 + $0xe0] sm:$0xff] %v1031
      %1106 = vst [vmem:[%s172 + $0xe8] sm:$0xff] %v1046
      %1107 = vst [vmem:[%s172 + $0xf0] sm:$0xff] %v1061
      %1108 = vst [vmem:[%s172 + $0xf8] sm:$0xff] %v1076
      %s1109 = smul.u32 32, %s14
      %p1110 = scmp.lt.s32.totalorder %s1109, 63
      %s1111 = scalar_select %p1110, %s1109, 63
      %s1112 = smul.addr %s1111, 8
      %s1113 = scalar_lea.vmem %s3, %s1112
      // Predicated region
      $region33: #{vae_forward.11} parent=31 // pred_check
        %p1114 = pneg %p100
      $region34: #{vae_forward.11} parent=31 // pred_check_branch
        %1116 = sbr.rel (%p1114) target = $region36
      $region35: #{vae_forward.11} parent=31 // pred_region
        %s1117 = smul.u32 32, %s14
      $region36: #{vae_forward.11} parent=31 // pred_fallthru
        _
    $region32: #{vae_forward.11} parent=5 // pred_fallthru
      _
    %p1118 = scmp.le.s32.totalorder 2, %s9
    // Predicated region
    $region37: #{vae_forward.11} parent=5 // pred_check
      %p1119 = pneg %p1118
    $region38: #{vae_forward.11} parent=5 // pred_check_branch
      %1121 = sbr.rel (%p1119) target = $region40
    $region39: #{vae_forward.11} parent=5 // pred_region
      %s1122 = ssub.s32 %s9, 2
      // Predicated region
      $region41: #{vae_forward.11} parent=39 // pred_check
        %p1123 = pneg %p106
      $region42: #{vae_forward.11} parent=39 // pred_check_branch
        %1125 = sbr.rel (%p1123) target = $region44
      $region43: #{vae_forward.11} parent=39 // pred_region
        %s1126 = smul.u32 32, %s15
        %p1127 = scmp.lt.s32.totalorder %s1126, 63
        %s1128 = scalar_select %p1127, %s1126, 63
        %s1129 = smul.addr %s1128, 8
        %s1130 = scalar_lea.vmem %s3, %s1129
      $region44: #{vae_forward.11} parent=39 // pred_fallthru
        _
    $region40: #{vae_forward.11} parent=5 // pred_fallthru
      _
  $region6: #{vae_forward.11} parent=0 // loop_footer
    %s13 = sadd.s32 1, %s9
  $region7: #{vae_forward.11} parent=0 // loop_footer_branch
    %8 = sbr.rel target = $region3
  $region8: #{vae_forward.11} parent=0 // loop_exit
    _

</llo_original>
